<compile_context>
chip_gen: v6e
topology: v6e:2x2x1
jax: 0.10.0
libtpu: 0.0.40
codegen_flags: <defaults>
</compile_context>

<pallas_src>
import functools

import numpy as np
import jax
import jax.numpy as jnp
from jax.experimental import pallas as pl
from jax.experimental.pallas import tpu as pltpu


# ---------------------------------------------------------------------------
# Fused Pallas kernel: fold1 (conv-BN-ReLU, conv-BN-ReLU, conv) followed by
# fold2 on the intermediate reconstruction, all on one (·, tile_n) point tile.
# Data layout inside the kernel is channels-first: (C, tile_n).
# ---------------------------------------------------------------------------
def _decoder_kernel(g_ref,
                    cw1_ref, w1g1_ref, w21_ref, b21_ref, w31_ref, b31_ref,
                    cw2_ref, w1g2_ref, w22_ref, b22_ref, w32_ref, b32_ref,
                    o_ref, *, mm_dtype):
    g = g_ref[...]                                    # (2, TN)  2D folding grid

    def mm(w, h):                                     # MXU matmul, f32 accumulate
        return jnp.dot(w.astype(mm_dtype), h.astype(mm_dtype),
                       preferred_element_type=jnp.float32)

    # ------------------------- fold 1 -------------------------
    # layer 1: split conv1x1.  Grid part = 2 VPU broadcast-MACs (K=2 would
    # waste the MXU); codeword part + bias + folded BN come in precomputed as
    # a per-batch (H, 1) column.
    w1g = w1g1_ref[...]                               # (H, 2)
    h = cw1_ref[0] + w1g[:, 0:1] * g[0:1, :] + w1g[:, 1:2] * g[1:2, :]
    h = jnp.maximum(h, 0.0)                           # BN folded; ReLU
    # layer 2: HxH conv1x1 (BN folded into w2/b2) + ReLU
    h = jnp.maximum(mm(w21_ref[...], h) + b21_ref[...], 0.0)
    # output layer of fold1 -> intermediate points, stays in VMEM/registers
    r1 = jnp.dot(w31_ref[...], h,
                 preferred_element_type=jnp.float32) + b31_ref[...]   # (3, TN)

    # ------------------------- fold 2 -------------------------
    w1g = w1g2_ref[...]                               # (H, 3)
    h = (cw2_ref[0]
         + w1g[:, 0:1] * r1[0:1, :]
         + w1g[:, 1:2] * r1[1:2, :]
         + w1g[:, 2:3] * r1[2:3, :])
    h = jnp.maximum(h, 0.0)
    h = jnp.maximum(mm(w22_ref[...], h) + b22_ref[...], 0.0)
    r2 = jnp.dot(w32_ref[...], h,
                 preferred_element_type=jnp.float32) + b32_ref[...]   # (3, TN)

    o_ref[0] = r2.astype(o_ref.dtype)                 # lane-dense (3, TN) store


# ---------------------------------------------------------------------------
# Parameter construction (raw, mirrors the PyTorch module layout) and the
# BN-folding / weight-splitting prep used by the kernel.
# ---------------------------------------------------------------------------
def init_fold_params(key, cg, c, hidden, out_ch):
    """Raw FoldingLayer params: Conv1d weights stored (OC, IC), BN gamma/beta."""
    ks = jax.random.split(key, 10)
    ic1 = cg + c

    def w(k, oc, ic):
        return jax.random.normal(k, (oc, ic), jnp.float32) / np.sqrt(ic)

    return {
        "w1": w(ks[0], hidden, ic1),
        "b1": 0.01 * jax.random.normal(ks[1], (hidden,), jnp.float32),
        "g1": 1.0 + 0.1 * jax.random.normal(ks[2], (hidden,), jnp.float32),
        "beta1": 0.1 * jax.random.normal(ks[3], (hidden,), jnp.float32),
        "w2": w(ks[4], hidden, hidden),
        "b2": 0.01 * jax.random.normal(ks[5], (hidden,), jnp.float32),
        "g2": 1.0 + 0.1 * jax.random.normal(ks[6], (hidden,), jnp.float32),
        "beta2": 0.1 * jax.random.normal(ks[7], (hidden,), jnp.float32),
        "w3": w(ks[8], out_ch, hidden),
        "b3": 0.01 * jax.random.normal(ks[9], (out_ch,), jnp.float32),
    }


def _fold_bn(p, cg, eps=1e-5):
    """Fold inference-mode BatchNorm (mean=0, var=1) into conv weights and
    split conv1 into grid / codeword parts."""
    s1 = p["g1"] / jnp.sqrt(1.0 + eps)
    s2 = p["g2"] / jnp.sqrt(1.0 + eps)
    w1 = p["w1"] * s1[:, None]
    b1 = p["b1"] * s1 + p["beta1"]
    w2 = p["w2"] * s2[:, None]
    b2 = p["b2"] * s2 + p["beta2"]
    return {
        "w1g": w1[:, :cg],                 # (H, Cg)  grid part of conv1
        "w1c": w1[:, cg:],                 # (H, C)   codeword part of conv1
        "b1": b1,                          # (H,)
        "w2": w2,                          # (H, H)
        "b2": b2.reshape(-1, 1),           # (H, 1)
        "w3": p["w3"],                     # (OC, H)
        "b3": p["b3"].reshape(-1, 1),      # (OC, 1)
    }


def make_decoder(key, in_channel, hidden, grid_side):
    k1, k2 = jax.random.split(key)
    p1 = init_fold_params(k1, 2, in_channel, hidden, 3)   # fold1: in = C + 2
    p2 = init_fold_params(k2, 3, in_channel, hidden, 3)   # fold2: in = C + 3
    xx = np.linspace(-0.3, 0.3, grid_side, dtype=np.float32)
    yy = np.linspace(-0.3, 0.3, grid_side, dtype=np.float32)
    g = np.array(np.meshgrid(xx, yy)).reshape(2, -1)      # (2, m), like torch .view(2,-1)
    return p1, p2, jnp.asarray(g)


# ---------------------------------------------------------------------------
# Wrapper: one pallas_call for the whole decoder forward.
# ---------------------------------------------------------------------------
def decoder_forward(x, p1, p2, grid2m, *, tile_n=None, mm_dtype=jnp.float32):
    """x: (B, C).  Returns (B, 3, m) — same axis convention as PyTorch."""
    B, _ = x.shape
    m = grid2m.shape[1]
    f1 = _fold_bn(p1, 2)
    f2 = _fold_bn(p2, 3)
    H = f1["w2"].shape[0]
    OC = f1["w3"].shape[0]

    # Collapse the grid: one big point tile per batch element (per-step
    # overhead dominates tiny tiles; activations easily fit VMEM).
    if tile_n is None:
        tile_n = m if m <= 2048 else 2048
    assert m % tile_n == 0 and (tile_n == m or tile_n % 128 == 0)
    nt = m // tile_n

    # Hoist the grid-invariant codeword term: (x @ W1c^T + b1) per batch,
    # laid out as an (H, 1) column the kernel broadcasts across the lane axis.
    cw1 = (x @ f1["w1c"].T + f1["b1"]).reshape(B, H, 1)
    cw2 = (x @ f2["w1c"].T + f2["b1"]).reshape(B, H, 1)

    def w_spec(shape):
        nd = len(shape)
        return pl.BlockSpec(shape, lambda b, n, _nd=nd: (0,) * _nd)

    cw_spec = pl.BlockSpec((1, H, 1), lambda b, n: (b, 0, 0))

    # NOTE: at PyTorch-default sizes (C=H=512, m=1024) set
    # pltpu.CompilerParams(vmem_limit_bytes=...) explicitly on v7x (64 MiB
    # physical VMEM) and use mm_dtype=jnp.bfloat16 on v6e/v7x.
    return pl.pallas_call(
        functools.partial(_decoder_kernel, mm_dtype=mm_dtype),
        out_shape=jax.ShapeDtypeStruct((B, OC, m), jnp.float32),
        grid_spec=pltpu.PrefetchScalarGridSpec(
            num_scalar_prefetch=0,
            grid=(B, nt),
            in_specs=[
                pl.BlockSpec((2, tile_n), lambda b, n: (0, n)),   # folding grid (shared over B)
                cw_spec,                                          # fold1 codeword column
                w_spec((H, 2)), w_spec((H, H)), w_spec((H, 1)),
                w_spec((OC, H)), w_spec((OC, 1)),
                cw_spec,                                          # fold2 codeword column
                w_spec((H, OC)), w_spec((H, H)), w_spec((H, 1)),
                w_spec((OC, H)), w_spec((OC, 1)),
            ],
            out_specs=pl.BlockSpec((1, OC, tile_n), lambda b, n: (b, 0, n)),
        ),
        compiler_params=pltpu.CompilerParams(
            dimension_semantics=("parallel", "parallel")),
    )(grid2m,
      cw1, f1["w1g"], f1["w2"], f1["b2"], f1["w3"], f1["b3"],
      cw2, f2["w1g"], f2["w2"], f2["b2"], f2["w3"], f2["b3"])


# ---------------------------------------------------------------------------
# Pure-JAX reference (mirrors the PyTorch module, channels-first) for checking
# ---------------------------------------------------------------------------
def _fold_ref(grids_cf, cw_cf, p, eps=1e-5):
    x = jnp.concatenate([grids_cf, cw_cf], axis=1)                      # (B, IC, N)
    h = jnp.einsum("oi,bin->bon", p["w1"], x) + p["b1"][None, :, None]
    h = h * (p["g1"] / jnp.sqrt(1.0 + eps))[None, :, None] + p["beta1"][None, :, None]
    h = jnp.maximum(h, 0.0)
    h = jnp.einsum("oi,bin->bon", p["w2"], h) + p["b2"][None, :, None]
    h = h * (p["g2"] / jnp.sqrt(1.0 + eps))[None, :, None] + p["beta2"][None, :, None]
    h = jnp.maximum(h, 0.0)
    return jnp.einsum("oi,bin->bon", p["w3"], h) + p["b3"][None, :, None]


def _decoder_ref(x, p1, p2, grid2m):
    B, C = x.shape
    m = grid2m.shape[1]
    grids = jnp.broadcast_to(grid2m[None], (B, 2, m))
    cw = jnp.broadcast_to(x[:, :, None], (B, C, m))
    r1 = _fold_ref(grids, cw, p1)
    r2 = _fold_ref(r1, cw, p2)
    return r2                                                           # (B, 3, m)


if __name__ == "__main__":
    # Small-shape configuration consistent with the module structure:
    # codeword dim C=64 (PyTorch default 512), hidden=128 (PyTorch 512),
    # grid 16x16 -> m=256 points (PyTorch 32x32 -> 1024), batch=2.
    B, C, HIDDEN, GRID_SIDE = 2, 64, 128, 16

    key = jax.random.PRNGKey(0)
    kparam, kx = jax.random.split(key)
    p1, p2, grid2m = make_decoder(kparam, C, HIDDEN, GRID_SIDE)
    x = jax.random.normal(kx, (B, C), jnp.float32)

    fwd = jax.jit(lambda xx: decoder_forward(xx, p1, p2, grid2m))
    out = jax.block_until_ready(fwd(x))

    ref = _decoder_ref(x, p1, p2, grid2m)
    assert out.shape == (B, 3, GRID_SIDE * GRID_SIDE), out.shape
    np.testing.assert_allclose(np.asarray(out), np.asarray(ref), rtol=1e-3, atol=1e-3)

    print("KERNEL_OK")
</pallas_src>

<mosaic_0001>
module attributes {stable_mosaic.version = 11 : i64} {
  func.func @_decoder_kernel(%arg0: i32, %arg1: i32, %arg2: memref<2x256xf32, #tpu.memory_space<vmem>>, %arg3: memref<1x128x1xf32, #tpu.memory_space<vmem>>, %arg4: memref<128x2xf32, #tpu.memory_space<vmem>>, %arg5: memref<128x128xf32, #tpu.memory_space<vmem>>, %arg6: memref<128x1xf32, #tpu.memory_space<vmem>>, %arg7: memref<3x128xf32, #tpu.memory_space<vmem>>, %arg8: memref<3x1xf32, #tpu.memory_space<vmem>>, %arg9: memref<1x128x1xf32, #tpu.memory_space<vmem>>, %arg10: memref<128x3xf32, #tpu.memory_space<vmem>>, %arg11: memref<128x128xf32, #tpu.memory_space<vmem>>, %arg12: memref<128x1xf32, #tpu.memory_space<vmem>>, %arg13: memref<3x128xf32, #tpu.memory_space<vmem>>, %arg14: memref<3x1xf32, #tpu.memory_space<vmem>>, %arg15: memref<1x3x256xf32, #tpu.memory_space<vmem>>) attributes {dimension_semantics = [#tpu.dimension_semantics<parallel>, #tpu.dimension_semantics<parallel>], iteration_bounds = array<i64: 2, 1>, scalar_prefetch = 0 : i64, scratch_operands = 0 : i64, tpu.core_type = #tpu.core_type<tc>, window_params = [{transform_indices = @transform_0, window_bounds = array<i64: 2, 256>}, {transform_indices = @transform_1, window_bounds = array<i64: 1, 128, 1>}, {pipeline_mode = #tpu.pipeline_mode<synchronous>, transform_indices = @transform_2, window_bounds = array<i64: 128, 2>}, {pipeline_mode = #tpu.pipeline_mode<synchronous>, transform_indices = @transform_3, window_bounds = array<i64: 128, 128>}, {pipeline_mode = #tpu.pipeline_mode<synchronous>, transform_indices = @transform_4, window_bounds = array<i64: 128, 1>}, {pipeline_mode = #tpu.pipeline_mode<synchronous>, transform_indices = @transform_5, window_bounds = array<i64: 3, 128>}, {pipeline_mode = #tpu.pipeline_mode<synchronous>, transform_indices = @transform_6, window_bounds = array<i64: 3, 1>}, {transform_indices = @transform_7, window_bounds = array<i64: 1, 128, 1>}, {pipeline_mode = #tpu.pipeline_mode<synchronous>, transform_indices = @transform_8, window_bounds = array<i64: 128, 3>}, {pipeline_mode = #tpu.pipeline_mode<synchronous>, transform_indices = @transform_9, window_bounds = array<i64: 128, 128>}, {pipeline_mode = #tpu.pipeline_mode<synchronous>, transform_indices = @transform_10, window_bounds = array<i64: 128, 1>}, {pipeline_mode = #tpu.pipeline_mode<synchronous>, transform_indices = @transform_11, window_bounds = array<i64: 3, 128>}, {pipeline_mode = #tpu.pipeline_mode<synchronous>, transform_indices = @transform_12, window_bounds = array<i64: 3, 1>}, {transform_indices = @transform_13, window_bounds = array<i64: 1, 3, 256>}]} {
    %c0 = arith.constant 0 : index
    %c0_0 = arith.constant 0 : index
    %0 = vector.load %arg2[%c0, %c0_0] : memref<2x256xf32, #tpu.memory_space<vmem>>, vector<2x256xf32>
    %c0_1 = arith.constant 0 : index
    %c0_2 = arith.constant 0 : index
    %1 = vector.load %arg4[%c0_1, %c0_2] : memref<128x2xf32, #tpu.memory_space<vmem>>, vector<128x2xf32>
    %c0_3 = arith.constant 0 : index
    %c0_4 = arith.constant 0 : index
    %c0_5 = arith.constant 0 : index
    %2 = vector.load %arg3[%c0_3, %c0_4, %c0_5] : memref<1x128x1xf32, #tpu.memory_space<vmem>>, vector<1x128x1xf32>
    %3 = vector.shape_cast %2 : vector<1x128x1xf32> to vector<128x1xf32>
    %4 = vector.extract_strided_slice %1 {offsets = [0, 0], sizes = [128, 1], strides = [1, 1]} : vector<128x2xf32> to vector<128x1xf32>
    %5 = vector.extract_strided_slice %0 {offsets = [0, 0], sizes = [1, 256], strides = [1, 1]} : vector<2x256xf32> to vector<1x256xf32>
    %6 = vector.broadcast %4 : vector<128x1xf32> to vector<128x256xf32>
    %7 = vector.broadcast %5 : vector<1x256xf32> to vector<128x256xf32>
    %8 = arith.mulf %6, %7 : vector<128x256xf32>
    %9 = vector.broadcast %3 : vector<128x1xf32> to vector<128x256xf32>
    %10 = arith.addf %9, %8 : vector<128x256xf32>
    %11 = vector.extract_strided_slice %1 {offsets = [0, 1], sizes = [128, 1], strides = [1, 1]} : vector<128x2xf32> to vector<128x1xf32>
    %12 = vector.extract_strided_slice %0 {offsets = [1, 0], sizes = [1, 256], strides = [1, 1]} : vector<2x256xf32> to vector<1x256xf32>
    %13 = vector.broadcast %11 : vector<128x1xf32> to vector<128x256xf32>
    %14 = vector.broadcast %12 : vector<1x256xf32> to vector<128x256xf32>
    %15 = arith.mulf %13, %14 : vector<128x256xf32>
    %16 = arith.addf %10, %15 : vector<128x256xf32>
    %cst = arith.constant 0.000000e+00 : f32
    %17 = vector.broadcast %cst : f32 to vector<128x256xf32>
    %18 = arith.maximumf %16, %17 : vector<128x256xf32>
    %c0_6 = arith.constant 0 : index
    %c0_7 = arith.constant 0 : index
    %19 = vector.load %arg5[%c0_6, %c0_7] : memref<128x128xf32, #tpu.memory_space<vmem>>, vector<128x128xf32>
    %cst_8 = arith.constant dense<0.000000e+00> : vector<128x256xf32>
    %20 = tpu.matmul %19, %18, %cst_8 {dimension_numbers = #tpu.dot_dimension_numbers<[1], [0], [0], [1], [0, 0, 1, 1], [], []>} : vector<128x128xf32>, vector<128x256xf32>, vector<128x256xf32> -> vector<128x256xf32>
    %c0_9 = arith.constant 0 : index
    %c0_10 = arith.constant 0 : index
    %21 = vector.load %arg6[%c0_9, %c0_10] : memref<128x1xf32, #tpu.memory_space<vmem>>, vector<128x1xf32>
    %22 = vector.broadcast %21 : vector<128x1xf32> to vector<128x256xf32>
    %23 = arith.addf %20, %22 : vector<128x256xf32>
    %cst_11 = arith.constant 0.000000e+00 : f32
    %24 = vector.broadcast %cst_11 : f32 to vector<128x256xf32>
    %25 = arith.maximumf %23, %24 : vector<128x256xf32>
    %c0_12 = arith.constant 0 : index
    %c0_13 = arith.constant 0 : index
    %26 = vector.load %arg7[%c0_12, %c0_13] : memref<3x128xf32, #tpu.memory_space<vmem>>, vector<3x128xf32>
    %cst_14 = arith.constant dense<0.000000e+00> : vector<3x256xf32>
    %27 = tpu.matmul %26, %25, %cst_14 {dimension_numbers = #tpu.dot_dimension_numbers<[1], [0], [0], [1], [0, 0, 1, 1], [], []>} : vector<3x128xf32>, vector<128x256xf32>, vector<3x256xf32> -> vector<3x256xf32>
    %c0_15 = arith.constant 0 : index
    %c0_16 = arith.constant 0 : index
    %28 = vector.load %arg8[%c0_15, %c0_16] : memref<3x1xf32, #tpu.memory_space<vmem>>, vector<3x1xf32>
    %29 = vector.broadcast %28 : vector<3x1xf32> to vector<3x256xf32>
    %30 = arith.addf %27, %29 : vector<3x256xf32>
    %c0_17 = arith.constant 0 : index
    %c0_18 = arith.constant 0 : index
    %31 = vector.load %arg10[%c0_17, %c0_18] : memref<128x3xf32, #tpu.memory_space<vmem>>, vector<128x3xf32>
    %c0_19 = arith.constant 0 : index
    %c0_20 = arith.constant 0 : index
    %c0_21 = arith.constant 0 : index
    %32 = vector.load %arg9[%c0_19, %c0_20, %c0_21] : memref<1x128x1xf32, #tpu.memory_space<vmem>>, vector<1x128x1xf32>
    %33 = vector.shape_cast %32 : vector<1x128x1xf32> to vector<128x1xf32>
    %34 = vector.extract_strided_slice %31 {offsets = [0, 0], sizes = [128, 1], strides = [1, 1]} : vector<128x3xf32> to vector<128x1xf32>
    %35 = vector.extract_strided_slice %30 {offsets = [0, 0], sizes = [1, 256], strides = [1, 1]} : vector<3x256xf32> to vector<1x256xf32>
    %36 = vector.broadcast %34 : vector<128x1xf32> to vector<128x256xf32>
    %37 = vector.broadcast %35 : vector<1x256xf32> to vector<128x256xf32>
    %38 = arith.mulf %36, %37 : vector<128x256xf32>
    %39 = vector.broadcast %33 : vector<128x1xf32> to vector<128x256xf32>
    %40 = arith.addf %39, %38 : vector<128x256xf32>
    %41 = vector.extract_strided_slice %31 {offsets = [0, 1], sizes = [128, 1], strides = [1, 1]} : vector<128x3xf32> to vector<128x1xf32>
    %42 = vector.extract_strided_slice %30 {offsets = [1, 0], sizes = [1, 256], strides = [1, 1]} : vector<3x256xf32> to vector<1x256xf32>
    %43 = vector.broadcast %41 : vector<128x1xf32> to vector<128x256xf32>
    %44 = vector.broadcast %42 : vector<1x256xf32> to vector<128x256xf32>
    %45 = arith.mulf %43, %44 : vector<128x256xf32>
    %46 = arith.addf %40, %45 : vector<128x256xf32>
    %47 = vector.extract_strided_slice %31 {offsets = [0, 2], sizes = [128, 1], strides = [1, 1]} : vector<128x3xf32> to vector<128x1xf32>
    %48 = vector.extract_strided_slice %30 {offsets = [2, 0], sizes = [1, 256], strides = [1, 1]} : vector<3x256xf32> to vector<1x256xf32>
    %49 = vector.broadcast %47 : vector<128x1xf32> to vector<128x256xf32>
    %50 = vector.broadcast %48 : vector<1x256xf32> to vector<128x256xf32>
    %51 = arith.mulf %49, %50 : vector<128x256xf32>
    %52 = arith.addf %46, %51 : vector<128x256xf32>
    %cst_22 = arith.constant 0.000000e+00 : f32
    %53 = vector.broadcast %cst_22 : f32 to vector<128x256xf32>
    %54 = arith.maximumf %52, %53 : vector<128x256xf32>
    %c0_23 = arith.constant 0 : index
    %c0_24 = arith.constant 0 : index
    %55 = vector.load %arg11[%c0_23, %c0_24] : memref<128x128xf32, #tpu.memory_space<vmem>>, vector<128x128xf32>
    %cst_25 = arith.constant dense<0.000000e+00> : vector<128x256xf32>
    %56 = tpu.matmul %55, %54, %cst_25 {dimension_numbers = #tpu.dot_dimension_numbers<[1], [0], [0], [1], [0, 0, 1, 1], [], []>} : vector<128x128xf32>, vector<128x256xf32>, vector<128x256xf32> -> vector<128x256xf32>
    %c0_26 = arith.constant 0 : index
    %c0_27 = arith.constant 0 : index
    %57 = vector.load %arg12[%c0_26, %c0_27] : memref<128x1xf32, #tpu.memory_space<vmem>>, vector<128x1xf32>
    %58 = vector.broadcast %57 : vector<128x1xf32> to vector<128x256xf32>
    %59 = arith.addf %56, %58 : vector<128x256xf32>
    %cst_28 = arith.constant 0.000000e+00 : f32
    %60 = vector.broadcast %cst_28 : f32 to vector<128x256xf32>
    %61 = arith.maximumf %59, %60 : vector<128x256xf32>
    %c0_29 = arith.constant 0 : index
    %c0_30 = arith.constant 0 : index
    %62 = vector.load %arg13[%c0_29, %c0_30] : memref<3x128xf32, #tpu.memory_space<vmem>>, vector<3x128xf32>
    %cst_31 = arith.constant dense<0.000000e+00> : vector<3x256xf32>
    %63 = tpu.matmul %62, %61, %cst_31 {dimension_numbers = #tpu.dot_dimension_numbers<[1], [0], [0], [1], [0, 0, 1, 1], [], []>} : vector<3x128xf32>, vector<128x256xf32>, vector<3x256xf32> -> vector<3x256xf32>
    %c0_32 = arith.constant 0 : index
    %c0_33 = arith.constant 0 : index
    %64 = vector.load %arg14[%c0_32, %c0_33] : memref<3x1xf32, #tpu.memory_space<vmem>>, vector<3x1xf32>
    %65 = vector.broadcast %64 : vector<3x1xf32> to vector<3x256xf32>
    %66 = arith.addf %63, %65 : vector<3x256xf32>
    %c0_34 = arith.constant 0 : index
    %c0_35 = arith.constant 0 : index
    %c0_36 = arith.constant 0 : index
    %67 = vector.load %arg15[%c0_34, %c0_35, %c0_36] : memref<1x3x256xf32, #tpu.memory_space<vmem>>, vector<1x3x256xf32>
    %68 = vector.shape_cast %67 : vector<1x3x256xf32> to vector<3x256xf32>
    %69 = vector.shape_cast %66 : vector<3x256xf32> to vector<1x3x256xf32>
    tpu.vector_store %arg15[%c0_34, %c0_35, %c0_36], %69 {strides = array<i32>} : memref<1x3x256xf32, #tpu.memory_space<vmem>>, vector<1x3x256xf32>,
    return
  }
  func.func @transform_0(%arg0: i32, %arg1: i32) -> (i32, i32) {
    %c0_i32 = arith.constant 0 : i32
    %c0_i32_0 = arith.constant 0 : i32
    return %c0_i32, %arg1 : i32, i32
  }
  func.func @transform_1(%arg0: i32, %arg1: i32) -> (i32, i32, i32) {
    %c0_i32 = arith.constant 0 : i32
    %c0_i32_0 = arith.constant 0 : i32
    %c0_i32_1 = arith.constant 0 : i32
    return %arg0, %c0_i32, %c0_i32_0 : i32, i32, i32
  }
  func.func @transform_2(%arg0: i32, %arg1: i32) -> (i32, i32) {
    %c0_i32 = arith.constant 0 : i32
    %c0_i32_0 = arith.constant 0 : i32
    %c0_i32_1 = arith.constant 0 : i32
    return %c0_i32, %c0_i32_0 : i32, i32
  }
  func.func @transform_3(%arg0: i32, %arg1: i32) -> (i32, i32) {
    %c0_i32 = arith.constant 0 : i32
    %c0_i32_0 = arith.constant 0 : i32
    %c0_i32_1 = arith.constant 0 : i32
    return %c0_i32, %c0_i32_0 : i32, i32
  }
  func.func @transform_4(%arg0: i32, %arg1: i32) -> (i32, i32) {
    %c0_i32 = arith.constant 0 : i32
    %c0_i32_0 = arith.constant 0 : i32
    %c0_i32_1 = arith.constant 0 : i32
    return %c0_i32, %c0_i32_0 : i32, i32
  }
  func.func @transform_5(%arg0: i32, %arg1: i32) -> (i32, i32) {
    %c0_i32 = arith.constant 0 : i32
    %c0_i32_0 = arith.constant 0 : i32
    %c0_i32_1 = arith.constant 0 : i32
    return %c0_i32, %c0_i32_0 : i32, i32
  }
  func.func @transform_6(%arg0: i32, %arg1: i32) -> (i32, i32) {
    %c0_i32 = arith.constant 0 : i32
    %c0_i32_0 = arith.constant 0 : i32
    %c0_i32_1 = arith.constant 0 : i32
    return %c0_i32, %c0_i32_0 : i32, i32
  }
  func.func @transform_7(%arg0: i32, %arg1: i32) -> (i32, i32, i32) {
    %c0_i32 = arith.constant 0 : i32
    %c0_i32_0 = arith.constant 0 : i32
    %c0_i32_1 = arith.constant 0 : i32
    return %arg0, %c0_i32, %c0_i32_0 : i32, i32, i32
  }
  func.func @transform_8(%arg0: i32, %arg1: i32) -> (i32, i32) {
    %c0_i32 = arith.constant 0 : i32
    %c0_i32_0 = arith.constant 0 : i32
    %c0_i32_1 = arith.constant 0 : i32
    return %c0_i32, %c0_i32_0 : i32, i32
  }
  func.func @transform_9(%arg0: i32, %arg1: i32) -> (i32, i32) {
    %c0_i32 = arith.constant 0 : i32
    %c0_i32_0 = arith.constant 0 : i32
    %c0_i32_1 = arith.constant 0 : i32
    return %c0_i32, %c0_i32_0 : i32, i32
  }
  func.func @transform_10(%arg0: i32, %arg1: i32) -> (i32, i32) {
    %c0_i32 = arith.constant 0 : i32
    %c0_i32_0 = arith.constant 0 : i32
    %c0_i32_1 = arith.constant 0 : i32
    return %c0_i32, %c0_i32_0 : i32, i32
  }
  func.func @transform_11(%arg0: i32, %arg1: i32) -> (i32, i32) {
    %c0_i32 = arith.constant 0 : i32
    %c0_i32_0 = arith.constant 0 : i32
    %c0_i32_1 = arith.constant 0 : i32
    return %c0_i32, %c0_i32_0 : i32, i32
  }
  func.func @transform_12(%arg0: i32, %arg1: i32) -> (i32, i32) {
    %c0_i32 = arith.constant 0 : i32
    %c0_i32_0 = arith.constant 0 : i32
    %c0_i32_1 = arith.constant 0 : i32
    return %c0_i32, %c0_i32_0 : i32, i32
  }
  func.func @transform_13(%arg0: i32, %arg1: i32) -> (i32, i32, i32) {
    %c0_i32 = arith.constant 0 : i32
    %c0_i32_0 = arith.constant 0 : i32
    return %arg0, %c0_i32, %arg1 : i32, i32, i32
  }
}

</mosaic_0001>

<llo_original>
// kernel: _lambda_.1
$region0: #{_lambda_.1}
  #allocation0 [shape = 'u32[]', space=smem, size = 0x4, offset = 0x4, fixed_abs, tag = 'smem constant byte address 0x4 - core index']
  #allocation1 [shape = 'u32[144,128]{1,0:T(1,128)}', space=vmem, size = 0x12000, scoped, tag = 'internal scratch']
  %s0 = inlined_call_operand.vmem [shape: f32[2,256], index: 0, kind: input, shape index: {}]
  %s1 = inlined_call_operand.vmem [shape: f32[2,128,1], index: 1, kind: input, shape index: {}]
  %s2 = inlined_call_operand.vmem [shape: f32[128,2], index: 2, kind: input, shape index: {}]
  %s3 = inlined_call_operand.vmem [shape: f32[128,128], index: 3, kind: input, shape index: {}]
  %s4 = inlined_call_operand.vmem [shape: f32[128,1], index: 4, kind: input, shape index: {}]
  %s5 = inlined_call_operand.vmem [shape: f32[3,128], index: 5, kind: input, shape index: {}]
  %s6 = inlined_call_operand.hbm [shape: f32[3,1], index: 6, kind: input, shape index: {}]
  %s7 = inlined_call_operand.vmem [shape: f32[2,128,1], index: 7, kind: input, shape index: {}]
  %s8 = inlined_call_operand.vmem [shape: f32[128,3], index: 8, kind: input, shape index: {}]
  %s9 = inlined_call_operand.vmem [shape: f32[128,128], index: 9, kind: input, shape index: {}]
  %s10 = inlined_call_operand.hbm [shape: f32[128,1], index: 10, kind: input, shape index: {}]
  %s11 = inlined_call_operand.vmem [shape: f32[3,128], index: 11, kind: input, shape index: {}]
  %s12 = inlined_call_operand.hbm [shape: f32[3,1], index: 12, kind: input, shape index: {}]
  %s13 = inlined_call_operand.vmem [shape: f32[2,3,256], index: 13, kind: output, shape index: {}]
  %s14 = sld [smem:[#allocation0]]
  $region97: #{_lambda_.1} parent=0
    _
  %s16 = ssub.s32 1, %s14
  %s17 = scalar_select 0, %s16, %s14
  $region1: #{_lambda_.1} parent=0
    #allocation2 [shape = 'u8[2048]{0}', space=vmem, size = 0x800, scoped, tag = 'input window, operand 6, single buffered']
    #allocation3 [shape = 's32[2]{0}', space=sflag, size = 0x8, scoped, tag = 'scoped memory for _lambda_.1']
    #allocation4 [shape = 'u8[65536]{0}', space=vmem, size = 0x10000, scoped, tag = 'input window, operand 10, single buffered']
    #allocation5 [shape = 's32[1]{0}', space=sflag, size = 0x4, scoped, tag = 'scoped memory for _lambda_.1']
    #allocation6 [shape = 'u8[2048]{0}', space=vmem, size = 0x800, scoped, tag = 'input window, operand 12, single buffered']
    %18 = vsyncpa [#allocation3], 0
    %19 = vsyncpa [#allocation5], 0
    loop: start=0, step=1, limit=4
    $region2: #{_lambda_.1} parent=1 // loop_pre_header
      _
    $region3: #{_lambda_.1} parent=1 // loop_header
      %s21 = sphi 0, %s25
      %p22 = scmp.ge.s32.totalorder %s21, 4
      %s28 = sphi 0, %s40
      %s29 = sphi 0, %s36
      %s30 = sphi 0, %s28
      %s31 = sphi 0, %s29
      %s32 = sphi 0, %s30
      %s33 = sphi 0, %s31
      %s43 = sphi 0, %s45
      %s46 = sphi 0, %s43
      %s47 = sphi 0, %s46
      %s63 = sphi 0, %s47
      %s69 = sphi 0, %s71
      %s72 = sphi 0, %s69
      %s73 = sphi 0, %s72
      %s89 = sphi 0, %s73
      %s93 = sphi 0, %s93
      %s95 = sphi 0, %s93
      %s96 = sphi 0, %s95
      %s110 = sphi 0, %s96
      %s114 = sphi 0, %s114
      %s116 = sphi 0, %s114
      %s117 = sphi 0, %s116
      %s131 = sphi 0, %s117
      %s135 = sphi 0, %s135
      %s137 = sphi 0, %s135
      %s138 = sphi 0, %s137
      %s152 = sphi 0, %s138
      %s156 = sphi 0, %s156
      %s158 = sphi 0, %s156
      %s159 = sphi 0, %s158
      %s173 = sphi 0, %s159
      %s177 = sphi 0, %s177
      %s179 = sphi 0, %s177
      %s180 = sphi 0, %s179
      %s194 = sphi 0, %s180
      %s200 = sphi 0, %s202
      %s203 = sphi 0, %s200
      %s204 = sphi 0, %s203
      %s220 = sphi 0, %s204
      %s224 = sphi 0, %s224
      %s226 = sphi 0, %s224
      %s227 = sphi 0, %s226
      %s241 = sphi 0, %s227
      %s245 = sphi 0, %s245
      %s247 = sphi 0, %s245
      %s248 = sphi 0, %s247
      %s262 = sphi 0, %s248
      %s266 = sphi 0, %s266
      %s268 = sphi 0, %s266
      %s269 = sphi 0, %s268
      %s283 = sphi 0, %s269
      %s287 = sphi 0, %s287
      %s289 = sphi 0, %s287
      %s290 = sphi 0, %s289
      %s304 = sphi 0, %s290
      %s308 = sphi 0, %s308
      %s310 = sphi 0, %s308
      %s311 = sphi 0, %s310
      %s325 = sphi 0, %s311
      %s333 = sphi 0, %s335
      %s336 = sphi 0, %s333
      %s337 = sphi 0, %s336
      %s353 = sphi 0, %s337
    $region4: #{_lambda_.1} parent=1 // loop_header_branch
      %24 = sbr.rel (%p22) target = $region8
    $region5: #{_lambda_.1} parent=1 // loop_body
      %s26 = ssub.s32 %s21, 1
      %s27 = ssub.s32 %s21, 2
      %s34 = sadd.s32 1, %s29
      %p35 = scmp.ge.s32.totalorder %s34, 1
      %s36 = scalar_select %p35, 0, %s34
      %s37 = sadd.s32 1, %s28
      %s38 = scalar_select %p35, %s37, %s28
      %p39 = scmp.ge.s32.totalorder %s38, 2
      %s40 = scalar_select %p39, 0, %s38
      %s41 = ssub.s32 %s29, %s36
      %p42 = scmp.eq.s32.totalorder %s41, 0
      %s44 = sadd.s32 %s43, 1
      %s45 = scalar_select %p42, %s43, %s44
      %p48 = pneg %p42
      %p49 = scmp.eq.s32.totalorder %s21, 1
      %p50 = por %p48, %p49
      %p51 = scmp.ne.s32.totalorder %s43, %s46
      %p52 = scmp.eq.s32.totalorder %s21, 0
      %p53 = por %p51, %p52
      %p54 = scmp.ne.s32.totalorder %s43, %s46
      %p55 = scmp.eq.s32.totalorder %s26, 1
      %p56 = por %p54, %p55
      %p57 = scmp.ne.s32.totalorder %s46, %s47
      %p58 = scmp.eq.s32.totalorder %s26, 0
      %p59 = por %p57, %p58
      %p60 = scmp.ne.s32.totalorder %s46, %s47
      %p61 = scmp.eq.s32.totalorder %s27, 1
      %p62 = por %p60, %p61
      %p64 = scmp.ne.s32.totalorder %s47, %s63
      %p65 = scmp.eq.s32.totalorder %s27, 0
      %p66 = por %p64, %p65
      %s67 = ssub.s32 %s28, %s40
      %p68 = scmp.eq.s32.totalorder %s67, 0
      %s70 = sadd.s32 %s69, 1
      %s71 = scalar_select %p68, %s69, %s70
      %p74 = pneg %p68
      %p75 = scmp.eq.s32.totalorder %s21, 1
      %p76 = por %p74, %p75
      %p77 = scmp.ne.s32.totalorder %s69, %s72
      %p78 = scmp.eq.s32.totalorder %s21, 0
      %p79 = por %p77, %p78
      %p80 = scmp.ne.s32.totalorder %s69, %s72
      %p81 = scmp.eq.s32.totalorder %s26, 1
      %p82 = por %p80, %p81
      %p83 = scmp.ne.s32.totalorder %s72, %s73
      %p84 = scmp.eq.s32.totalorder %s26, 0
      %p85 = por %p83, %p84
      %p86 = scmp.ne.s32.totalorder %s72, %s73
      %p87 = scmp.eq.s32.totalorder %s27, 1
      %p88 = por %p86, %p87
      %p90 = scmp.ne.s32.totalorder %s73, %s89
      %p91 = scmp.eq.s32.totalorder %s27, 0
      %p92 = por %p90, %p91
      %s94 = sadd.s32 %s93, 1
      %p97 = scmp.eq.s32.totalorder %s21, 1
      %p98 = scmp.ne.s32.totalorder %s93, %s95
      %p99 = scmp.eq.s32.totalorder %s21, 0
      %p100 = por %p98, %p99
      %p101 = scmp.ne.s32.totalorder %s93, %s95
      %p102 = scmp.eq.s32.totalorder %s26, 1
      %p103 = por %p101, %p102
      %p104 = scmp.ne.s32.totalorder %s95, %s96
      %p105 = scmp.eq.s32.totalorder %s26, 0
      %p106 = por %p104, %p105
      %p107 = scmp.ne.s32.totalorder %s95, %s96
      %p108 = scmp.eq.s32.totalorder %s27, 1
      %p109 = por %p107, %p108
      %p111 = scmp.ne.s32.totalorder %s96, %s110
      %p112 = scmp.eq.s32.totalorder %s27, 0
      %p113 = por %p111, %p112
      %s115 = sadd.s32 %s114, 1
      %p118 = scmp.eq.s32.totalorder %s21, 1
      %p119 = scmp.ne.s32.totalorder %s114, %s116
      %p120 = scmp.eq.s32.totalorder %s21, 0
      %p121 = por %p119, %p120
      %p122 = scmp.ne.s32.totalorder %s114, %s116
      %p123 = scmp.eq.s32.totalorder %s26, 1
      %p124 = por %p122, %p123
      %p125 = scmp.ne.s32.totalorder %s116, %s117
      %p126 = scmp.eq.s32.totalorder %s26, 0
      %p127 = por %p125, %p126
      %p128 = scmp.ne.s32.totalorder %s116, %s117
      %p129 = scmp.eq.s32.totalorder %s27, 1
      %p130 = por %p128, %p129
      %p132 = scmp.ne.s32.totalorder %s117, %s131
      %p133 = scmp.eq.s32.totalorder %s27, 0
      %p134 = por %p132, %p133
      %s136 = sadd.s32 %s135, 1
      %p139 = scmp.eq.s32.totalorder %s21, 1
      %p140 = scmp.ne.s32.totalorder %s135, %s137
      %p141 = scmp.eq.s32.totalorder %s21, 0
      %p142 = por %p140, %p141
      %p143 = scmp.ne.s32.totalorder %s135, %s137
      %p144 = scmp.eq.s32.totalorder %s26, 1
      %p145 = por %p143, %p144
      %p146 = scmp.ne.s32.totalorder %s137, %s138
      %p147 = scmp.eq.s32.totalorder %s26, 0
      %p148 = por %p146, %p147
      %p149 = scmp.ne.s32.totalorder %s137, %s138
      %p150 = scmp.eq.s32.totalorder %s27, 1
      %p151 = por %p149, %p150
      %p153 = scmp.ne.s32.totalorder %s138, %s152
      %p154 = scmp.eq.s32.totalorder %s27, 0
      %p155 = por %p153, %p154
      %s157 = sadd.s32 %s156, 1
      %p160 = scmp.eq.s32.totalorder %s21, 1
      %p161 = scmp.ne.s32.totalorder %s156, %s158
      %p162 = scmp.eq.s32.totalorder %s21, 0
      %p163 = por %p161, %p162
      %p164 = scmp.ne.s32.totalorder %s156, %s158
      %p165 = scmp.eq.s32.totalorder %s26, 1
      %p166 = por %p164, %p165
      %p167 = scmp.ne.s32.totalorder %s158, %s159
      %p168 = scmp.eq.s32.totalorder %s26, 0
      %p169 = por %p167, %p168
      %p170 = scmp.ne.s32.totalorder %s158, %s159
      %p171 = scmp.eq.s32.totalorder %s27, 1
      %p172 = por %p170, %p171
      %p174 = scmp.ne.s32.totalorder %s159, %s173
      %p175 = scmp.eq.s32.totalorder %s27, 0
      %p176 = por %p174, %p175
      %s178 = sadd.s32 %s177, 1
      %p181 = scmp.eq.s32.totalorder %s21, 1
      %p182 = scmp.ne.s32.totalorder %s177, %s179
      %p183 = scmp.eq.s32.totalorder %s21, 0
      %p184 = por %p182, %p183
      %p185 = scmp.ne.s32.totalorder %s177, %s179
      %p186 = scmp.eq.s32.totalorder %s26, 1
      %p187 = por %p185, %p186
      %p188 = scmp.ne.s32.totalorder %s179, %s180
      %p189 = scmp.eq.s32.totalorder %s26, 0
      %p190 = por %p188, %p189
      %p191 = scmp.ne.s32.totalorder %s179, %s180
      %p192 = scmp.eq.s32.totalorder %s27, 1
      %p193 = por %p191, %p192
      %p195 = scmp.ne.s32.totalorder %s180, %s194
      %p196 = scmp.eq.s32.totalorder %s27, 0
      %p197 = por %p195, %p196
      %s198 = ssub.s32 %s28, %s40
      %p199 = scmp.eq.s32.totalorder %s198, 0
      %s201 = sadd.s32 %s200, 1
      %s202 = scalar_select %p199, %s200, %s201
      %p205 = pneg %p199
      %p206 = scmp.eq.s32.totalorder %s21, 1
      %p207 = por %p205, %p206
      %p208 = scmp.ne.s32.totalorder %s200, %s203
      %p209 = scmp.eq.s32.totalorder %s21, 0
      %p210 = por %p208, %p209
      %p211 = scmp.ne.s32.totalorder %s200, %s203
      %p212 = scmp.eq.s32.totalorder %s26, 1
      %p213 = por %p211, %p212
      %p214 = scmp.ne.s32.totalorder %s203, %s204
      %p215 = scmp.eq.s32.totalorder %s26, 0
      %p216 = por %p214, %p215
      %p217 = scmp.ne.s32.totalorder %s203, %s204
      %p218 = scmp.eq.s32.totalorder %s27, 1
      %p219 = por %p217, %p218
      %p221 = scmp.ne.s32.totalorder %s204, %s220
      %p222 = scmp.eq.s32.totalorder %s27, 0
      %p223 = por %p221, %p222
      %s225 = sadd.s32 %s224, 1
      %p228 = scmp.eq.s32.totalorder %s21, 1
      %p229 = scmp.ne.s32.totalorder %s224, %s226
      %p230 = scmp.eq.s32.totalorder %s21, 0
      %p231 = por %p229, %p230
      %p232 = scmp.ne.s32.totalorder %s224, %s226
      %p233 = scmp.eq.s32.totalorder %s26, 1
      %p234 = por %p232, %p233
      %p235 = scmp.ne.s32.totalorder %s226, %s227
      %p236 = scmp.eq.s32.totalorder %s26, 0
      %p237 = por %p235, %p236
      %p238 = scmp.ne.s32.totalorder %s226, %s227
      %p239 = scmp.eq.s32.totalorder %s27, 1
      %p240 = por %p238, %p239
      %p242 = scmp.ne.s32.totalorder %s227, %s241
      %p243 = scmp.eq.s32.totalorder %s27, 0
      %p244 = por %p242, %p243
      %s246 = sadd.s32 %s245, 1
      %p249 = scmp.eq.s32.totalorder %s21, 1
      %p250 = scmp.ne.s32.totalorder %s245, %s247
      %p251 = scmp.eq.s32.totalorder %s21, 0
      %p252 = por %p250, %p251
      %p253 = scmp.ne.s32.totalorder %s245, %s247
      %p254 = scmp.eq.s32.totalorder %s26, 1
      %p255 = por %p253, %p254
      %p256 = scmp.ne.s32.totalorder %s247, %s248
      %p257 = scmp.eq.s32.totalorder %s26, 0
      %p258 = por %p256, %p257
      %p259 = scmp.ne.s32.totalorder %s247, %s248
      %p260 = scmp.eq.s32.totalorder %s27, 1
      %p261 = por %p259, %p260
      %p263 = scmp.ne.s32.totalorder %s248, %s262
      %p264 = scmp.eq.s32.totalorder %s27, 0
      %p265 = por %p263, %p264
      %s267 = sadd.s32 %s266, 1
      %p270 = scmp.eq.s32.totalorder %s21, 1
      %p271 = scmp.ne.s32.totalorder %s266, %s268
      %p272 = scmp.eq.s32.totalorder %s21, 0
      %p273 = por %p271, %p272
      %p274 = scmp.ne.s32.totalorder %s266, %s268
      %p275 = scmp.eq.s32.totalorder %s26, 1
      %p276 = por %p274, %p275
      %p277 = scmp.ne.s32.totalorder %s268, %s269
      %p278 = scmp.eq.s32.totalorder %s26, 0
      %p279 = por %p277, %p278
      %p280 = scmp.ne.s32.totalorder %s268, %s269
      %p281 = scmp.eq.s32.totalorder %s27, 1
      %p282 = por %p280, %p281
      %p284 = scmp.ne.s32.totalorder %s269, %s283
      %p285 = scmp.eq.s32.totalorder %s27, 0
      %p286 = por %p284, %p285
      %s288 = sadd.s32 %s287, 1
      %p291 = scmp.eq.s32.totalorder %s21, 1
      %p292 = scmp.ne.s32.totalorder %s287, %s289
      %p293 = scmp.eq.s32.totalorder %s21, 0
      %p294 = por %p292, %p293
      %p295 = scmp.ne.s32.totalorder %s287, %s289
      %p296 = scmp.eq.s32.totalorder %s26, 1
      %p297 = por %p295, %p296
      %p298 = scmp.ne.s32.totalorder %s289, %s290
      %p299 = scmp.eq.s32.totalorder %s26, 0
      %p300 = por %p298, %p299
      %p301 = scmp.ne.s32.totalorder %s289, %s290
      %p302 = scmp.eq.s32.totalorder %s27, 1
      %p303 = por %p301, %p302
      %p305 = scmp.ne.s32.totalorder %s290, %s304
      %p306 = scmp.eq.s32.totalorder %s27, 0
      %p307 = por %p305, %p306
      %s309 = sadd.s32 %s308, 1
      %p312 = scmp.eq.s32.totalorder %s21, 1
      %p313 = scmp.ne.s32.totalorder %s308, %s310
      %p314 = scmp.eq.s32.totalorder %s21, 0
      %p315 = por %p313, %p314
      %p316 = scmp.ne.s32.totalorder %s308, %s310
      %p317 = scmp.eq.s32.totalorder %s26, 1
      %p318 = por %p316, %p317
      %p319 = scmp.ne.s32.totalorder %s310, %s311
      %p320 = scmp.eq.s32.totalorder %s26, 0
      %p321 = por %p319, %p320
      %p322 = scmp.ne.s32.totalorder %s310, %s311
      %p323 = scmp.eq.s32.totalorder %s27, 1
      %p324 = por %p322, %p323
      %p326 = scmp.ne.s32.totalorder %s311, %s325
      %p327 = scmp.eq.s32.totalorder %s27, 0
      %p328 = por %p326, %p327
      %s329 = ssub.s32 %s28, %s40
      %s330 = ssub.s32 %s29, %s36
      %s331 = sor.u32 %s329, %s330
      %p332 = scmp.eq.s32.totalorder %s331, 0
      %s334 = sadd.s32 %s333, 1
      %s335 = scalar_select %p332, %s333, %s334
      %p338 = pneg %p332
      %p339 = scmp.eq.s32.totalorder %s21, 1
      %p340 = por %p338, %p339
      %p341 = scmp.ne.s32.totalorder %s333, %s336
      %p342 = scmp.eq.s32.totalorder %s21, 0
      %p343 = por %p341, %p342
      %p344 = scmp.ne.s32.totalorder %s333, %s336
      %p345 = scmp.eq.s32.totalorder %s26, 1
      %p346 = por %p344, %p345
      %p347 = scmp.ne.s32.totalorder %s336, %s337
      %p348 = scmp.eq.s32.totalorder %s26, 0
      %p349 = por %p347, %p348
      %p350 = scmp.ne.s32.totalorder %s336, %s337
      %p351 = scmp.eq.s32.totalorder %s27, 1
      %p352 = por %p350, %p351
      %p354 = scmp.ne.s32.totalorder %s337, %s353
      %p355 = scmp.eq.s32.totalorder %s27, 0
      %p356 = por %p354, %p355
      %p357 = scmp.le.s32.totalorder 1, %s21
      %p358 = scmp.lt.s32.totalorder %s21, 3
      %p359 = pnand %p357, %p358
      %p360 = pneg %p359
      // Predicated region
      $region9: #{_lambda_.1} parent=5 // pred_check
        _
      $region10: #{_lambda_.1} parent=5 // pred_check_branch
        %362 = sbr.rel (%p359) target = $region12
      $region11: #{_lambda_.1} parent=5 // pred_region
        %s363 = ssub.s32 %s21, 1
        // Predicated region
        $region13: #{_lambda_.1} parent=11 // pred_check
          %p364 = pneg %p59
        $region14: #{_lambda_.1} parent=11 // pred_check_branch
          %366 = sbr.rel (%p364) target = $region16
        $region15: #{_lambda_.1} parent=11 // pred_region
          %s367 = smul.u32 2, %s31
          %p368 = scmp.lt.s32.totalorder %s367, 1
          %s369 = scalar_select %p368, %s367, 1
          %s370 = smul.addr %s369, 2
          %s371 = scalar_lea.vmem %s0, %s370
          %s372 = smul.u32 2, %s31
        $region16: #{_lambda_.1} parent=11 // pred_fallthru
          _
        // Predicated region
        $region17: #{_lambda_.1} parent=11 // pred_check
          %p373 = pneg %p106
        $region18: #{_lambda_.1} parent=11 // pred_check_branch
          %375 = sbr.rel (%p373) target = $region20
        $region19: #{_lambda_.1} parent=11 // pred_region
          _
        $region20: #{_lambda_.1} parent=11 // pred_fallthru
          _
        // Predicated region
        $region21: #{_lambda_.1} parent=11 // pred_check
          %p376 = pneg %p127
        $region22: #{_lambda_.1} parent=11 // pred_check_branch
          %378 = sbr.rel (%p376) target = $region24
        $region23: #{_lambda_.1} parent=11 // pred_region
          _
        $region24: #{_lambda_.1} parent=11 // pred_fallthru
          _
        // Predicated region
        $region25: #{_lambda_.1} parent=11 // pred_check
          %p379 = pneg %p148
        $region26: #{_lambda_.1} parent=11 // pred_check_branch
          %381 = sbr.rel (%p379) target = $region28
        $region27: #{_lambda_.1} parent=11 // pred_region
          _
        $region28: #{_lambda_.1} parent=11 // pred_fallthru
          _
        // Predicated region
        $region29: #{_lambda_.1} parent=11 // pred_check
          %p382 = pneg %p169
        $region30: #{_lambda_.1} parent=11 // pred_check_branch
          %384 = sbr.rel (%p382) target = $region32
        $region31: #{_lambda_.1} parent=11 // pred_region
          _
        $region32: #{_lambda_.1} parent=11 // pred_fallthru
          _
        // Predicated region
        $region33: #{_lambda_.1} parent=11 // pred_check
          %p385 = pneg %p190
        $region34: #{_lambda_.1} parent=11 // pred_check_branch
          %387 = sbr.rel (%p385) target = $region36
        $region35: #{_lambda_.1} parent=11 // pred_region
          %s389 = ssub.s32 64, 64
          %390 = vsyncadd [#allocation3], %s389
          %s392 = sshll.u32 [#allocation2], 4
          %s393 = int_to_ptr.vmem [resolvable:$true] %s392
          %395 = dma.hbm_to_vmem [thread:$0]  %s6, 64, %s393, [#allocation3]
        $region36: #{_lambda_.1} parent=11 // pred_fallthru
          _
        // Predicated region
        $region37: #{_lambda_.1} parent=11 // pred_check
          %p396 = pneg %p237
        $region38: #{_lambda_.1} parent=11 // pred_check_branch
          %398 = sbr.rel (%p396) target = $region40
        $region39: #{_lambda_.1} parent=11 // pred_region
          _
        $region40: #{_lambda_.1} parent=11 // pred_fallthru
          _
        // Predicated region
        $region41: #{_lambda_.1} parent=11 // pred_check
          %p399 = pneg %p258
        $region42: #{_lambda_.1} parent=11 // pred_check_branch
          %401 = sbr.rel (%p399) target = $region44
        $region43: #{_lambda_.1} parent=11 // pred_region
          _
        $region44: #{_lambda_.1} parent=11 // pred_fallthru
          _
        // Predicated region
        $region45: #{_lambda_.1} parent=11 // pred_check
          %p402 = pneg %p279
        $region46: #{_lambda_.1} parent=11 // pred_check_branch
          %404 = sbr.rel (%p402) target = $region48
        $region47: #{_lambda_.1} parent=11 // pred_region
          %s406 = ssub.s32 2048, 2048
          %407 = vsyncadd [#allocation5], %s406
          %s408 = sshll.u32 [#allocation4], 4
          %s409 = int_to_ptr.vmem [resolvable:$true] %s408
          %414 = dma.hbm_to_vmem [thread:$0]  %s10, 2048, %s409, [#allocation5], 128, 128, 8
        $region48: #{_lambda_.1} parent=11 // pred_fallthru
          _
        // Predicated region
        $region49: #{_lambda_.1} parent=11 // pred_check
          %p415 = pneg %p300
        $region50: #{_lambda_.1} parent=11 // pred_check_branch
          %417 = sbr.rel (%p415) target = $region52
        $region51: #{_lambda_.1} parent=11 // pred_region
          _
        $region52: #{_lambda_.1} parent=11 // pred_fallthru
          _
        // Predicated region
        $region53: #{_lambda_.1} parent=11 // pred_check
          %p418 = pneg %p321
        $region54: #{_lambda_.1} parent=11 // pred_check_branch
          %420 = sbr.rel (%p418) target = $region56
        $region55: #{_lambda_.1} parent=11 // pred_region
          %s422 = ssub.s32 64, 64
          %423 = vsyncadd [#allocation5], %s422
          %s425 = sshll.u32 [#allocation6], 4
          %s426 = int_to_ptr.vmem [resolvable:$true] %s425
          %428 = dma.hbm_to_vmem [thread:$0]  %s12, 64, %s426, [#allocation5]
        $region56: #{_lambda_.1} parent=11 // pred_fallthru
          _
      $region12: #{_lambda_.1} parent=5 // pred_fallthru
        _
      %p429 = scmp.lt.s32.totalorder %s21, 2
      // Predicated region
      $region57: #{_lambda_.1} parent=5 // pred_check
        %p430 = pneg %p429
      $region58: #{_lambda_.1} parent=5 // pred_check_branch
        %432 = sbr.rel (%p430) target = $region60
      $region59: #{_lambda_.1} parent=5 // pred_region
        // Predicated region
        $region61: #{_lambda_.1} parent=59 // pred_check
          %p433 = pneg %p79
        $region62: #{_lambda_.1} parent=59 // pred_check_branch
          %435 = sbr.rel (%p433) target = $region64
        $region63: #{_lambda_.1} parent=59 // pred_region
          %p436 = scmp.lt.s32.totalorder %s28, 1
          %s437 = scalar_select %p436, %s28, 1
          %s438 = smul.addr %s437, 16
          %s439 = smul.addr %s438, 8
          %s440 = scalar_lea.vmem %s1, %s439
        $region64: #{_lambda_.1} parent=59 // pred_fallthru
          _
        // Predicated region
        $region65: #{_lambda_.1} parent=59 // pred_check
          %p441 = pneg %p210
        $region66: #{_lambda_.1} parent=59 // pred_check_branch
          %443 = sbr.rel (%p441) target = $region68
        $region67: #{_lambda_.1} parent=59 // pred_region
          %p444 = scmp.lt.s32.totalorder %s28, 1
          %s445 = scalar_select %p444, %s28, 1
          %s446 = smul.addr %s445, 16
          %s447 = smul.addr %s446, 8
          %s448 = scalar_lea.vmem %s7, %s447
        $region68: #{_lambda_.1} parent=59 // pred_fallthru
          _
      $region60: #{_lambda_.1} parent=5 // pred_fallthru
        _
      %p449 = scmp.le.s32.totalorder 1, %s21
      %p450 = scmp.lt.s32.totalorder %s21, 3
      %p451 = pnand %p449, %p450
      %p452 = pneg %p451
      // Predicated region
      $region69: #{_lambda_.1} parent=5 // pred_check
        _
      $region70: #{_lambda_.1} parent=5 // pred_check_branch
        %454 = sbr.rel (%p451) target = $region72
      $region71: #{_lambda_.1} parent=5 // pred_region
        %s455 = ssub.s32 %s21, 1
        // Predicated region
        $region73: #{_lambda_.1} parent=71 // pred_check
          %p456 = pneg %p190
        $region74: #{_lambda_.1} parent=71 // pred_check_branch
          %458 = sbr.rel (%p456) target = $region76
        $region75: #{_lambda_.1} parent=71 // pred_region
          %459 = dma.done [#allocation3], 64
        $region76: #{_lambda_.1} parent=71 // pred_fallthru
          _
        // Predicated region
        $region77: #{_lambda_.1} parent=71 // pred_check
          %p460 = pneg %p279
        $region78: #{_lambda_.1} parent=71 // pred_check_branch
          %462 = sbr.rel (%p460) target = $region80
        $region79: #{_lambda_.1} parent=71 // pred_region
          %463 = dma.done [#allocation5], 2048
        $region80: #{_lambda_.1} parent=71 // pred_fallthru
          _
        // Predicated region
        $region81: #{_lambda_.1} parent=71 // pred_check
          %p464 = pneg %p321
        $region82: #{_lambda_.1} parent=71 // pred_check_branch
          %466 = sbr.rel (%p464) target = $region84
        $region83: #{_lambda_.1} parent=71 // pred_region
          %467 = dma.done [#allocation5], 64
        $region84: #{_lambda_.1} parent=71 // pred_fallthru
          _
        %s468 = smul.u32 2, %s31
        %p469 = scmp.lt.s32.totalorder %s468, 1
        %s470 = scalar_select %p469, %s468, 1
        %s471 = smul.addr %s470, 2
        %s472 = scalar_lea.vmem %s0, %s471
        %p473 = pneg %p59
        %p474 = pneg %p56
        %p475 = scmp.lt.s32.totalorder %s30, 1
        %s476 = scalar_select %p475, %s30, 1
        %s477 = smul.addr %s476, 16
        %s478 = smul.addr %s477, 8
        %s479 = scalar_lea.vmem %s1, %s478
        %p480 = pneg %p85
        %p481 = pneg %p82
        %p482 = pneg %p106
        %p483 = pneg %p103
        %p484 = pneg %p127
        %p485 = pneg %p124
        %p486 = pneg %p148
        %p487 = pneg %p145
        %p488 = pneg %p169
        %p489 = pneg %p166
        %p490 = pneg %p190
        %p491 = pneg %p187
        %p492 = scmp.lt.s32.totalorder %s30, 1
        %s493 = scalar_select %p492, %s30, 1
        %s494 = smul.addr %s493, 16
        %s495 = smul.addr %s494, 8
        %s496 = scalar_lea.vmem %s7, %s495
        %p497 = pneg %p216
        %p498 = pneg %p213
        %p499 = pneg %p237
        %p500 = pneg %p234
        %p501 = pneg %p258
        %p502 = pneg %p255
        %p503 = pneg %p279
        %p504 = pneg %p276
        %p505 = pneg %p300
        %p506 = pneg %p297
        %p507 = pneg %p321
        %p508 = pneg %p318
        %p509 = pneg %p349
        %p510 = pneg %p346
        %s511 = smul.u32 2, %s31
        %p512 = scmp.lt.s32.totalorder %s30, 1
        %s513 = scalar_select %p512, %s30, 1
        %p514 = scmp.lt.s32.totalorder %s511, 1
        %s515 = scalar_select %p514, %s511, 1
        %s516 = smul.addr %s513, 2
        %s517 = sadd.s32 %s515, %s516
        %s518 = smul.addr %s517, 4
        %s519 = scalar_lea.vmem %s13, %s518
        %s520 = smul.u32 2, %s31
        %p521 = scmp.lt.s32.totalorder %s520, 1
        %s522 = scalar_select %p521, %s520, 1
        %s523 = smul.addr %s522, 2
        %s524 = scalar_lea.vmem %s0, %s523
        %s525 = smul.u32 2, %s31
        %p526 = scmp.lt.s32.totalorder %s30, 1
        %s527 = scalar_select %p526, %s30, 1
        %s528 = smul.addr %s527, 16
        %s529 = smul.addr %s528, 8
        %s530 = scalar_lea.vmem %s1, %s529
        %p531 = scmp.lt.s32.totalorder %s30, 1
        %s532 = scalar_select %p531, %s30, 1
        %s533 = smul.addr %s532, 16
        %s534 = smul.addr %s533, 8
        %s535 = scalar_lea.vmem %s7, %s534
        %s536 = smul.u32 2, %s31
        %p537 = scmp.lt.s32.totalorder %s30, 1
        %s538 = scalar_select %p537, %s30, 1
        %p539 = scmp.lt.s32.totalorder %s536, 1
        %s540 = scalar_select %p539, %s536, 1
        %s541 = smul.addr %s538, 2
        %s542 = sadd.s32 %s540, %s541
        %s543 = smul.addr %s542, 4
        %s544 = scalar_lea.vmem %s13, %s543
        %s545 = smul.u32 2, %s31
        %v546 = vld [vmem:[%s524] sm:$0xf]
        %v547 = vld [vmem:[%s2] sm:$0xff]
        %v548 = vld [vmem:[%s2 + $0x8] sm:$0xff]
        %v549 = vld [vmem:[%s2 + $0x10] sm:$0xff]
        %v550 = vld [vmem:[%s2 + $0x18] sm:$0xff]
        %v551 = vld [vmem:[%s2 + $0x20] sm:$0xff]
        %v552 = vld [vmem:[%s2 + $0x28] sm:$0xff]
        %v553 = vld [vmem:[%s2 + $0x30] sm:$0xff]
        %v554 = vld [vmem:[%s2 + $0x38] sm:$0xff]
        %v555 = vld [vmem:[%s2 + $0x40] sm:$0xff]
        %v556 = vld [vmem:[%s2 + $0x48] sm:$0xff]
        %v557 = vld [vmem:[%s2 + $0x50] sm:$0xff]
        %v558 = vld [vmem:[%s2 + $0x58] sm:$0xff]
        %v559 = vld [vmem:[%s2 + $0x60] sm:$0xff]
        %v560 = vld [vmem:[%s2 + $0x68] sm:$0xff]
        %v561 = vld [vmem:[%s2 + $0x70] sm:$0xff]
        %v562 = vld [vmem:[%s2 + $0x78] sm:$0xff]
        %v563 = vld [vmem:[%s530] sm:$0xff]
        %v564 = vld [vmem:[%s530 + $0x8] sm:$0xff]
        %v565 = vld [vmem:[%s530 + $0x10] sm:$0xff]
        %v566 = vld [vmem:[%s530 + $0x18] sm:$0xff]
        %v567 = vld [vmem:[%s530 + $0x20] sm:$0xff]
        %v568 = vld [vmem:[%s530 + $0x28] sm:$0xff]
        %v569 = vld [vmem:[%s530 + $0x30] sm:$0xff]
        %v570 = vld [vmem:[%s530 + $0x38] sm:$0xff]
        %v571 = vld [vmem:[%s530 + $0x40] sm:$0xff]
        %v572 = vld [vmem:[%s530 + $0x48] sm:$0xff]
        %v573 = vld [vmem:[%s530 + $0x50] sm:$0xff]
        %v574 = vld [vmem:[%s530 + $0x58] sm:$0xff]
        %v575 = vld [vmem:[%s530 + $0x60] sm:$0xff]
        %v576 = vld [vmem:[%s530 + $0x68] sm:$0xff]
        %v577 = vld [vmem:[%s530 + $0x70] sm:$0xff]
        %v578 = vld [vmem:[%s530 + $0x78] sm:$0xff]
        %580 = vset.pattern.permute.xlu0 0
        %581 = vperm.xlu0 %580, %v547
        %v582 = vpop.permute.xlu0 %581
        %585 = vset.pattern.permute.xlu0 0
        %586 = vperm.xlu0 %585, %v548
        %v587 = vpop.permute.xlu0 %586
        %590 = vset.pattern.permute.xlu0 0
        %591 = vperm.xlu0 %590, %v549
        %v592 = vpop.permute.xlu0 %591
        %595 = vset.pattern.permute.xlu0 0
        %596 = vperm.xlu0 %595, %v550
        %v597 = vpop.permute.xlu0 %596
        %600 = vset.pattern.permute.xlu0 0
        %601 = vperm.xlu0 %600, %v551
        %v602 = vpop.permute.xlu0 %601
        %605 = vset.pattern.permute.xlu0 0
        %606 = vperm.xlu0 %605, %v552
        %v607 = vpop.permute.xlu0 %606
        %610 = vset.pattern.permute.xlu0 0
        %611 = vperm.xlu0 %610, %v553
        %v612 = vpop.permute.xlu0 %611
        %615 = vset.pattern.permute.xlu0 0
        %616 = vperm.xlu0 %615, %v554
        %v617 = vpop.permute.xlu0 %616
        %620 = vset.pattern.permute.xlu0 0
        %621 = vperm.xlu0 %620, %v555
        %v622 = vpop.permute.xlu0 %621
        %625 = vset.pattern.permute.xlu0 0
        %626 = vperm.xlu0 %625, %v556
        %v627 = vpop.permute.xlu0 %626
        %630 = vset.pattern.permute.xlu0 0
        %631 = vperm.xlu0 %630, %v557
        %v632 = vpop.permute.xlu0 %631
        %635 = vset.pattern.permute.xlu0 0
        %636 = vperm.xlu0 %635, %v558
        %v637 = vpop.permute.xlu0 %636
        %640 = vset.pattern.permute.xlu0 0
        %641 = vperm.xlu0 %640, %v559
        %v642 = vpop.permute.xlu0 %641
        %645 = vset.pattern.permute.xlu0 0
        %646 = vperm.xlu0 %645, %v560
        %v647 = vpop.permute.xlu0 %646
        %650 = vset.pattern.permute.xlu0 0
        %651 = vperm.xlu0 %650, %v561
        %v652 = vpop.permute.xlu0 %651
        %655 = vset.pattern.permute.xlu0 0
        %656 = vperm.xlu0 %655, %v562
        %v657 = vpop.permute.xlu0 %656
        %v660 = vlaneseq
        %v661 = vshrl.u32 %v660, 7
        %v662 = vsub.s32 0, %v661
        %v663 = vrot.slane %v546, %v662
        %v664 = vlaneseq
        %v665 = vshrl.u32 %v664, 7
        %v666 = vsub.s32 2, %v665
        %v667 = vrot.slane %v546, %v666
        %v670 = vlaneseq
        %v671 = vshrl.u32 %v670, 7
        %v672 = vsub.s32 0, %v671
        %v673 = vrot.slane %v663, %v672
        %v674 = vlaneseq
        %v675 = vshrl.u32 %v674, 7
        %v676 = vsub.s32 0, %v675
        %v677 = vrot.slane %v667, %v676
        %v678 = vmul.f32 %v582, %v673
        %v679 = vmul.f32 %v582, %v677
        %v680 = vmul.f32 %v587, %v673
        %v681 = vmul.f32 %v587, %v677
        %v682 = vmul.f32 %v592, %v673
        %v683 = vmul.f32 %v592, %v677
        %v684 = vmul.f32 %v597, %v673
        %v685 = vmul.f32 %v597, %v677
        %v686 = vmul.f32 %v602, %v673
        %v687 = vmul.f32 %v602, %v677
        %v688 = vmul.f32 %v607, %v673
        %v689 = vmul.f32 %v607, %v677
        %v690 = vmul.f32 %v612, %v673
        %v691 = vmul.f32 %v612, %v677
        %v692 = vmul.f32 %v617, %v673
        %v693 = vmul.f32 %v617, %v677
        %v694 = vmul.f32 %v622, %v673
        %v695 = vmul.f32 %v622, %v677
        %v696 = vmul.f32 %v627, %v673
        %v697 = vmul.f32 %v627, %v677
        %v698 = vmul.f32 %v632, %v673
        %v699 = vmul.f32 %v632, %v677
        %v700 = vmul.f32 %v637, %v673
        %v701 = vmul.f32 %v637, %v677
        %v702 = vmul.f32 %v642, %v673
        %v703 = vmul.f32 %v642, %v677
        %v704 = vmul.f32 %v647, %v673
        %v705 = vmul.f32 %v647, %v677
        %v706 = vmul.f32 %v652, %v673
        %v707 = vmul.f32 %v652, %v677
        %v708 = vmul.f32 %v657, %v673
        %v709 = vmul.f32 %v657, %v677
        %711 = vset.pattern.permute.xlu0 0
        %712 = vperm.xlu0 %711, %v563
        %v713 = vpop.permute.xlu0 %712
        %716 = vset.pattern.permute.xlu0 0
        %717 = vperm.xlu0 %716, %v564
        %v718 = vpop.permute.xlu0 %717
        %721 = vset.pattern.permute.xlu0 0
        %722 = vperm.xlu0 %721, %v565
        %v723 = vpop.permute.xlu0 %722
        %726 = vset.pattern.permute.xlu0 0
        %727 = vperm.xlu0 %726, %v566
        %v728 = vpop.permute.xlu0 %727
        %731 = vset.pattern.permute.xlu0 0
        %732 = vperm.xlu0 %731, %v567
        %v733 = vpop.permute.xlu0 %732
        %736 = vset.pattern.permute.xlu0 0
        %737 = vperm.xlu0 %736, %v568
        %v738 = vpop.permute.xlu0 %737
        %741 = vset.pattern.permute.xlu0 0
        %742 = vperm.xlu0 %741, %v569
        %v743 = vpop.permute.xlu0 %742
        %746 = vset.pattern.permute.xlu0 0
        %747 = vperm.xlu0 %746, %v570
        %v748 = vpop.permute.xlu0 %747
        %751 = vset.pattern.permute.xlu0 0
        %752 = vperm.xlu0 %751, %v571
        %v753 = vpop.permute.xlu0 %752
        %756 = vset.pattern.permute.xlu0 0
        %757 = vperm.xlu0 %756, %v572
        %v758 = vpop.permute.xlu0 %757
        %761 = vset.pattern.permute.xlu0 0
        %762 = vperm.xlu0 %761, %v573
        %v763 = vpop.permute.xlu0 %762
        %766 = vset.pattern.permute.xlu0 0
        %767 = vperm.xlu0 %766, %v574
        %v768 = vpop.permute.xlu0 %767
        %771 = vset.pattern.permute.xlu0 0
        %772 = vperm.xlu0 %771, %v575
        %v773 = vpop.permute.xlu0 %772
        %776 = vset.pattern.permute.xlu0 0
        %777 = vperm.xlu0 %776, %v576
        %v778 = vpop.permute.xlu0 %777
        %781 = vset.pattern.permute.xlu0 0
        %782 = vperm.xlu0 %781, %v577
        %v783 = vpop.permute.xlu0 %782
        %786 = vset.pattern.permute.xlu0 0
        %787 = vperm.xlu0 %786, %v578
        %v788 = vpop.permute.xlu0 %787
        %v790 = vadd.f32 %v713, %v678
        %v791 = vadd.f32 %v713, %v679
        %v792 = vadd.f32 %v718, %v680
        %v793 = vadd.f32 %v718, %v681
        %v794 = vadd.f32 %v723, %v682
        %v795 = vadd.f32 %v723, %v683
        %v796 = vadd.f32 %v728, %v684
        %v797 = vadd.f32 %v728, %v685
        %v798 = vadd.f32 %v733, %v686
        %v799 = vadd.f32 %v733, %v687
        %v800 = vadd.f32 %v738, %v688
        %v801 = vadd.f32 %v738, %v689
        %v802 = vadd.f32 %v743, %v690
        %v803 = vadd.f32 %v743, %v691
        %v804 = vadd.f32 %v748, %v692
        %v805 = vadd.f32 %v748, %v693
        %v806 = vadd.f32 %v753, %v694
        %v807 = vadd.f32 %v753, %v695
        %v808 = vadd.f32 %v758, %v696
        %v809 = vadd.f32 %v758, %v697
        %v810 = vadd.f32 %v763, %v698
        %v811 = vadd.f32 %v763, %v699
        %v812 = vadd.f32 %v768, %v700
        %v813 = vadd.f32 %v768, %v701
        %v814 = vadd.f32 %v773, %v702
        %v815 = vadd.f32 %v773, %v703
        %v816 = vadd.f32 %v778, %v704
        %v817 = vadd.f32 %v778, %v705
        %v818 = vadd.f32 %v783, %v706
        %v819 = vadd.f32 %v783, %v707
        %v820 = vadd.f32 %v788, %v708
        %v821 = vadd.f32 %v788, %v709
        %822 = vset.pattern.permute.xlu0 1
        %823 = vperm.xlu0 %822, %v547
        %v824 = vpop.permute.xlu0 %823
        %826 = vset.pattern.permute.xlu0 1
        %827 = vperm.xlu0 %826, %v548
        %v828 = vpop.permute.xlu0 %827
        %830 = vset.pattern.permute.xlu0 1
        %831 = vperm.xlu0 %830, %v549
        %v832 = vpop.permute.xlu0 %831
        %834 = vset.pattern.permute.xlu0 1
        %835 = vperm.xlu0 %834, %v550
        %v836 = vpop.permute.xlu0 %835
        %838 = vset.pattern.permute.xlu0 1
        %839 = vperm.xlu0 %838, %v551
        %v840 = vpop.permute.xlu0 %839
        %842 = vset.pattern.permute.xlu0 1
        %843 = vperm.xlu0 %842, %v552
        %v844 = vpop.permute.xlu0 %843
        %846 = vset.pattern.permute.xlu0 1
        %847 = vperm.xlu0 %846, %v553
        %v848 = vpop.permute.xlu0 %847
        %850 = vset.pattern.permute.xlu0 1
        %851 = vperm.xlu0 %850, %v554
        %v852 = vpop.permute.xlu0 %851
        %854 = vset.pattern.permute.xlu0 1
        %855 = vperm.xlu0 %854, %v555
        %v856 = vpop.permute.xlu0 %855
        %858 = vset.pattern.permute.xlu0 1
        %859 = vperm.xlu0 %858, %v556
        %v860 = vpop.permute.xlu0 %859
        %862 = vset.pattern.permute.xlu0 1
        %863 = vperm.xlu0 %862, %v557
        %v864 = vpop.permute.xlu0 %863
        %866 = vset.pattern.permute.xlu0 1
        %867 = vperm.xlu0 %866, %v558
        %v868 = vpop.permute.xlu0 %867
        %870 = vset.pattern.permute.xlu0 1
        %871 = vperm.xlu0 %870, %v559
        %v872 = vpop.permute.xlu0 %871
        %874 = vset.pattern.permute.xlu0 1
        %875 = vperm.xlu0 %874, %v560
        %v876 = vpop.permute.xlu0 %875
        %878 = vset.pattern.permute.xlu0 1
        %879 = vperm.xlu0 %878, %v561
        %v880 = vpop.permute.xlu0 %879
        %882 = vset.pattern.permute.xlu0 1
        %883 = vperm.xlu0 %882, %v562
        %v884 = vpop.permute.xlu0 %883
        %v886 = vlaneseq
        %v887 = vshrl.u32 %v886, 7
        %v888 = vsub.s32 1, %v887
        %v889 = vrot.slane %v546, %v888
        %v890 = vlaneseq
        %v891 = vshrl.u32 %v890, 7
        %v892 = vsub.s32 3, %v891
        %v893 = vrot.slane %v546, %v892
        %v896 = vlaneseq
        %v897 = vshrl.u32 %v896, 7
        %v898 = vsub.s32 1, %v897
        %v899 = vrot.slane %v889, %v898
        %v900 = vlaneseq
        %v901 = vshrl.u32 %v900, 7
        %v902 = vsub.s32 1, %v901
        %v903 = vrot.slane %v893, %v902
        %v904 = vmul.f32 %v824, %v899
        %v905 = vmul.f32 %v824, %v903
        %v906 = vmul.f32 %v828, %v899
        %v907 = vmul.f32 %v828, %v903
        %v908 = vmul.f32 %v832, %v899
        %v909 = vmul.f32 %v832, %v903
        %v910 = vmul.f32 %v836, %v899
        %v911 = vmul.f32 %v836, %v903
        %v912 = vmul.f32 %v840, %v899
        %v913 = vmul.f32 %v840, %v903
        %v914 = vmul.f32 %v844, %v899
        %v915 = vmul.f32 %v844, %v903
        %v916 = vmul.f32 %v848, %v899
        %v917 = vmul.f32 %v848, %v903
        %v918 = vmul.f32 %v852, %v899
        %v919 = vmul.f32 %v852, %v903
        %v920 = vmul.f32 %v856, %v899
        %v921 = vmul.f32 %v856, %v903
        %v922 = vmul.f32 %v860, %v899
        %v923 = vmul.f32 %v860, %v903
        %v924 = vmul.f32 %v864, %v899
        %v925 = vmul.f32 %v864, %v903
        %v926 = vmul.f32 %v868, %v899
        %v927 = vmul.f32 %v868, %v903
        %v928 = vmul.f32 %v872, %v899
        %v929 = vmul.f32 %v872, %v903
        %v930 = vmul.f32 %v876, %v899
        %v931 = vmul.f32 %v876, %v903
        %v932 = vmul.f32 %v880, %v899
        %v933 = vmul.f32 %v880, %v903
        %v934 = vmul.f32 %v884, %v899
        %v935 = vmul.f32 %v884, %v903
        %v936 = vadd.f32 %v790, %v904
        %v937 = vadd.f32 %v791, %v905
        %v938 = vadd.f32 %v792, %v906
        %v939 = vadd.f32 %v793, %v907
        %v940 = vadd.f32 %v794, %v908
        %v941 = vadd.f32 %v795, %v909
        %v942 = vadd.f32 %v796, %v910
        %v943 = vadd.f32 %v797, %v911
        %v944 = vadd.f32 %v798, %v912
        %v945 = vadd.f32 %v799, %v913
        %v946 = vadd.f32 %v800, %v914
        %v947 = vadd.f32 %v801, %v915
        %v948 = vadd.f32 %v802, %v916
        %v949 = vadd.f32 %v803, %v917
        %v950 = vadd.f32 %v804, %v918
        %v951 = vadd.f32 %v805, %v919
        %v952 = vadd.f32 %v806, %v920
        %v953 = vadd.f32 %v807, %v921
        %v954 = vadd.f32 %v808, %v922
        %v955 = vadd.f32 %v809, %v923
        %v956 = vadd.f32 %v810, %v924
        %v957 = vadd.f32 %v811, %v925
        %v958 = vadd.f32 %v812, %v926
        %v959 = vadd.f32 %v813, %v927
        %v960 = vadd.f32 %v814, %v928
        %v961 = vadd.f32 %v815, %v929
        %v962 = vadd.f32 %v816, %v930
        %v963 = vadd.f32 %v817, %v931
        %v964 = vadd.f32 %v818, %v932
        %v965 = vadd.f32 %v819, %v933
        %v966 = vadd.f32 %v820, %v934
        %v967 = vadd.f32 %v821, %v935
        %v968 = vmax.f32 %v936, 0.0
        %v969 = vmax.f32 %v937, 0.0
        %v970 = vmax.f32 %v938, 0.0
        %v971 = vmax.f32 %v939, 0.0
        %v972 = vmax.f32 %v940, 0.0
        %v973 = vmax.f32 %v941, 0.0
        %v974 = vmax.f32 %v942, 0.0
        %v975 = vmax.f32 %v943, 0.0
        %v976 = vmax.f32 %v944, 0.0
        %v977 = vmax.f32 %v945, 0.0
        %v978 = vmax.f32 %v946, 0.0
        %v979 = vmax.f32 %v947, 0.0
        %v980 = vmax.f32 %v948, 0.0
        %v981 = vmax.f32 %v949, 0.0
        %v982 = vmax.f32 %v950, 0.0
        %v983 = vmax.f32 %v951, 0.0
        %v984 = vmax.f32 %v952, 0.0
        %v985 = vmax.f32 %v953, 0.0
        %v986 = vmax.f32 %v954, 0.0
        %v987 = vmax.f32 %v955, 0.0
        %v988 = vmax.f32 %v956, 0.0
        %v989 = vmax.f32 %v957, 0.0
        %v990 = vmax.f32 %v958, 0.0
        %v991 = vmax.f32 %v959, 0.0
        %v992 = vmax.f32 %v960, 0.0
        %v993 = vmax.f32 %v961, 0.0
        %v994 = vmax.f32 %v962, 0.0
        %v995 = vmax.f32 %v963, 0.0
        %v996 = vmax.f32 %v964, 0.0
        %v997 = vmax.f32 %v965, 0.0
        %v998 = vmax.f32 %v966, 0.0
        %v999 = vmax.f32 %v967, 0.0
        %v1000 = vld [vmem:[%s3] sm:$0xff]
        %v1001 = vld [vmem:[%s3 + $0x8] sm:$0xff]
        %v1002 = vld [vmem:[%s3 + $0x10] sm:$0xff]
        %v1003 = vld [vmem:[%s3 + $0x18] sm:$0xff]
        %v1004 = vld [vmem:[%s3 + $0x20] sm:$0xff]
        %v1005 = vld [vmem:[%s3 + $0x28] sm:$0xff]
        %v1006 = vld [vmem:[%s3 + $0x30] sm:$0xff]
        %v1007 = vld [vmem:[%s3 + $0x38] sm:$0xff]
        %v1008 = vld [vmem:[%s3 + $0x40] sm:$0xff]
        %v1009 = vld [vmem:[%s3 + $0x48] sm:$0xff]
        %v1010 = vld [vmem:[%s3 + $0x50] sm:$0xff]
        %v1011 = vld [vmem:[%s3 + $0x58] sm:$0xff]
        %v1012 = vld [vmem:[%s3 + $0x60] sm:$0xff]
        %v1013 = vld [vmem:[%s3 + $0x68] sm:$0xff]
        %v1014 = vld [vmem:[%s3 + $0x70] sm:$0xff]
        %v1015 = vld [vmem:[%s3 + $0x78] sm:$0xff]
        %v1016 = vld [vmem:[%s4] sm:$0xff]
        %v1017 = vld [vmem:[%s4 + $0x8] sm:$0xff]
        %v1018 = vld [vmem:[%s4 + $0x10] sm:$0xff]
        %v1019 = vld [vmem:[%s4 + $0x18] sm:$0xff]
        %v1020 = vld [vmem:[%s4 + $0x20] sm:$0xff]
        %v1021 = vld [vmem:[%s4 + $0x28] sm:$0xff]
        %v1022 = vld [vmem:[%s4 + $0x30] sm:$0xff]
        %v1023 = vld [vmem:[%s4 + $0x38] sm:$0xff]
        %v1024 = vld [vmem:[%s4 + $0x40] sm:$0xff]
        %v1025 = vld [vmem:[%s4 + $0x48] sm:$0xff]
        %v1026 = vld [vmem:[%s4 + $0x50] sm:$0xff]
        %v1027 = vld [vmem:[%s4 + $0x58] sm:$0xff]
        %v1028 = vld [vmem:[%s4 + $0x60] sm:$0xff]
        %v1029 = vld [vmem:[%s4 + $0x68] sm:$0xff]
        %v1030 = vld [vmem:[%s4 + $0x70] sm:$0xff]
        %v1031 = vld [vmem:[%s4 + $0x78] sm:$0xff]
        %1033 = vset.pattern.permute.xlu0 0
        %1034 = vperm.xlu0 %1033, %v1016
        %v1035 = vpop.permute.xlu0 %1034
        %1038 = vset.pattern.permute.xlu0 0
        %1039 = vperm.xlu0 %1038, %v1017
        %v1040 = vpop.permute.xlu0 %1039
        %1043 = vset.pattern.permute.xlu0 0
        %1044 = vperm.xlu0 %1043, %v1018
        %v1045 = vpop.permute.xlu0 %1044
        %1048 = vset.pattern.permute.xlu0 0
        %1049 = vperm.xlu0 %1048, %v1019
        %v1050 = vpop.permute.xlu0 %1049
        %1053 = vset.pattern.permute.xlu0 0
        %1054 = vperm.xlu0 %1053, %v1020
        %v1055 = vpop.permute.xlu0 %1054
        %1058 = vset.pattern.permute.xlu0 0
        %1059 = vperm.xlu0 %1058, %v1021
        %v1060 = vpop.permute.xlu0 %1059
        %1063 = vset.pattern.permute.xlu0 0
        %1064 = vperm.xlu0 %1063, %v1022
        %v1065 = vpop.permute.xlu0 %1064
        %1068 = vset.pattern.permute.xlu0 0
        %1069 = vperm.xlu0 %1068, %v1023
        %v1070 = vpop.permute.xlu0 %1069
        %1073 = vset.pattern.permute.xlu0 0
        %1074 = vperm.xlu0 %1073, %v1024
        %v1075 = vpop.permute.xlu0 %1074
        %1078 = vset.pattern.permute.xlu0 0
        %1079 = vperm.xlu0 %1078, %v1025
        %v1080 = vpop.permute.xlu0 %1079
        %1083 = vset.pattern.permute.xlu0 0
        %1084 = vperm.xlu0 %1083, %v1026
        %v1085 = vpop.permute.xlu0 %1084
        %1088 = vset.pattern.permute.xlu0 0
        %1089 = vperm.xlu0 %1088, %v1027
        %v1090 = vpop.permute.xlu0 %1089
        %1093 = vset.pattern.permute.xlu0 0
        %1094 = vperm.xlu0 %1093, %v1028
        %v1095 = vpop.permute.xlu0 %1094
        %1098 = vset.pattern.permute.xlu0 0
        %1099 = vperm.xlu0 %1098, %v1029
        %v1100 = vpop.permute.xlu0 %1099
        %1103 = vset.pattern.permute.xlu0 0
        %1104 = vperm.xlu0 %1103, %v1030
        %v1105 = vpop.permute.xlu0 %1104
        %1108 = vset.pattern.permute.xlu0 0
        %1109 = vperm.xlu0 %1108, %v1031
        %v1110 = vpop.permute.xlu0 %1109
        %1112 = vmatprep.subr.mxu0 %v999
        %1113 = vmatpush1.msra.mxu0 %v998
        %1114 = vmatprep.subr.mxu0 %v997
        %1115 = vmatpush1.msra.mxu0 %v996
        %1116 = vmatprep.subr.mxu0 %v995
        %1117 = vmatpush1.msra.mxu0 %v994
        %1118 = vmatprep.subr.mxu0 %v993
        %1119 = vmatpush1.msra.mxu0 %v992
        %1120 = vmatprep.subr.mxu0 %v991
        %1121 = vmatpush1.msra.mxu0 %v990
        %1122 = vmatprep.subr.mxu0 %v989
        %1123 = vmatpush1.msra.mxu0 %v988
        %1124 = vmatprep.subr.mxu0 %v987
        %1125 = vmatpush1.msra.mxu0 %v986
        %1126 = vmatprep.subr.mxu0 %v985
        %1127 = vmatpush1.msra.mxu0 %v984
        %1128 = vmatprep.subr.mxu0 %v983
        %1129 = vmatpush1.msra.mxu0 %v982
        %1130 = vmatprep.subr.mxu0 %v981
        %1131 = vmatpush1.msra.mxu0 %v980
        %1132 = vmatprep.subr.mxu0 %v979
        %1133 = vmatpush1.msra.mxu0 %v978
        %1134 = vmatprep.subr.mxu0 %v977
        %1135 = vmatpush1.msra.mxu0 %v976
        %1136 = vmatprep.subr.mxu0 %v975
        %1137 = vmatpush1.msra.mxu0 %v974
        %1138 = vmatprep.subr.mxu0 %v973
        %1139 = vmatpush1.msra.mxu0 %v972
        %1140 = vmatprep.subr.mxu0 %v971
        %1141 = vmatpush1.msra.mxu0 %v970
        %1142 = vmatprep.subr.mxu0 %v969
        %1143 = vmatpush1.msra.mxu0 %v968
        %1144 = vmatprep.subr.mxu0 0.0
        %1145 = vmatpush2.msra.mxu0 0.0
        %1146 = vmatprep.subr.mxu0 0.0
        %1147 = vmatpush2.msra.mxu0 0.0
        %1148 = vmatprep.subr.mxu0 0.0
        %1149 = vmatpush2.msra.mxu0 0.0
        %1150 = vmatprep.subr.mxu0 0.0
        %1151 = vmatpush2.msra.mxu0 0.0
        %1152 = vmatprep.subr.mxu0 0.0
        %1153 = vmatpush2.msra.mxu0 0.0
        %1154 = vmatprep.subr.mxu0 0.0
        %1155 = vmatpush2.msra.mxu0 0.0
        %1156 = vmatprep.subr.mxu0 0.0
        %1157 = vmatpush2.msra.mxu0 0.0
        %1158 = vmatprep.subr.mxu0 0.0
        %1159 = vmatpush2.msra.mxu0 0.0
        %1160 = vmatprep.subr.mxu0 0.0
        %1161 = vmatpush2.msra.mxu0 0.0
        %1162 = vmatprep.subr.mxu0 0.0
        %1163 = vmatpush2.msra.mxu0 0.0
        %1164 = vmatprep.subr.mxu0 0.0
        %1165 = vmatpush2.msra.mxu0 0.0
        %1166 = vmatprep.subr.mxu0 0.0
        %1167 = vmatpush2.msra.mxu0 0.0
        %1168 = vmatprep.subr.mxu0 0.0
        %1169 = vmatpush2.msra.mxu0 0.0
        %1170 = vmatprep.subr.mxu0 0.0
        %1171 = vmatpush2.msra.mxu0 0.0
        %1172 = vmatprep.subr.mxu0 0.0
        %1173 = vmatpush2.msra.mxu0 0.0
        %1174 = vmatprep.subr.mxu0 0.0
        %1175 = vmatpush2.msra.mxu0 0.0
        %1176 = vmatprep.mubr.f32.mxu0 0.0
        %1177 = vmatmul.mubr.f32.gmra.mxu0 %v1000
        %v1178 = vpop.f32.mrf.mxu0
        %v1179 = vadd.f32 %v1035, %v1178
        %v1180 = vpop.f32.mrf.mxu0
        %v1181 = vadd.f32 %v1035, %v1180
        %1182 = vmatprep.mubr.f32.mxu0 0.0
        %1183 = vmatmul.mubr.f32.gmra.mxu0 %v1001
        %v1184 = vpop.f32.mrf.mxu0
        %v1185 = vadd.f32 %v1040, %v1184
        %v1186 = vpop.f32.mrf.mxu0
        %v1187 = vadd.f32 %v1040, %v1186
        %1188 = vmatprep.mubr.f32.mxu0 0.0
        %1189 = vmatmul.mubr.f32.gmra.mxu0 %v1002
        %v1190 = vpop.f32.mrf.mxu0
        %v1191 = vadd.f32 %v1045, %v1190
        %v1192 = vpop.f32.mrf.mxu0
        %v1193 = vadd.f32 %v1045, %v1192
        %1194 = vmatprep.mubr.f32.mxu0 0.0
        %1195 = vmatmul.mubr.f32.gmra.mxu0 %v1003
        %v1196 = vpop.f32.mrf.mxu0
        %v1197 = vadd.f32 %v1050, %v1196
        %v1198 = vpop.f32.mrf.mxu0
        %v1199 = vadd.f32 %v1050, %v1198
        %1200 = vmatprep.mubr.f32.mxu0 0.0
        %1201 = vmatmul.mubr.f32.gmra.mxu0 %v1004
        %v1202 = vpop.f32.mrf.mxu0
        %v1203 = vadd.f32 %v1055, %v1202
        %v1204 = vpop.f32.mrf.mxu0
        %v1205 = vadd.f32 %v1055, %v1204
        %1206 = vmatprep.mubr.f32.mxu0 0.0
        %1207 = vmatmul.mubr.f32.gmra.mxu0 %v1005
        %v1208 = vpop.f32.mrf.mxu0
        %v1209 = vadd.f32 %v1060, %v1208
        %v1210 = vpop.f32.mrf.mxu0
        %v1211 = vadd.f32 %v1060, %v1210
        %1212 = vmatprep.mubr.f32.mxu0 0.0
        %1213 = vmatmul.mubr.f32.gmra.mxu0 %v1006
        %v1214 = vpop.f32.mrf.mxu0
        %v1215 = vadd.f32 %v1065, %v1214
        %v1216 = vpop.f32.mrf.mxu0
        %v1217 = vadd.f32 %v1065, %v1216
        %1218 = vmatprep.mubr.f32.mxu0 0.0
        %1219 = vmatmul.mubr.f32.gmra.mxu0 %v1007
        %v1220 = vpop.f32.mrf.mxu0
        %v1221 = vadd.f32 %v1070, %v1220
        %v1222 = vpop.f32.mrf.mxu0
        %v1223 = vadd.f32 %v1070, %v1222
        %1224 = vmatprep.mubr.f32.mxu0 0.0
        %1225 = vmatmul.mubr.f32.gmra.mxu0 %v1008
        %v1226 = vpop.f32.mrf.mxu0
        %v1227 = vadd.f32 %v1075, %v1226
        %v1228 = vpop.f32.mrf.mxu0
        %v1229 = vadd.f32 %v1075, %v1228
        %1230 = vmatprep.mubr.f32.mxu0 0.0
        %1231 = vmatmul.mubr.f32.gmra.mxu0 %v1009
        %v1232 = vpop.f32.mrf.mxu0
        %v1233 = vadd.f32 %v1080, %v1232
        %v1234 = vpop.f32.mrf.mxu0
        %v1235 = vadd.f32 %v1080, %v1234
        %1236 = vmatprep.mubr.f32.mxu0 0.0
        %1237 = vmatmul.mubr.f32.gmra.mxu0 %v1010
        %v1238 = vpop.f32.mrf.mxu0
        %v1239 = vadd.f32 %v1085, %v1238
        %v1240 = vpop.f32.mrf.mxu0
        %v1241 = vadd.f32 %v1085, %v1240
        %1242 = vmatprep.mubr.f32.mxu0 0.0
        %1243 = vmatmul.mubr.f32.gmra.mxu0 %v1011
        %v1244 = vpop.f32.mrf.mxu0
        %v1245 = vadd.f32 %v1090, %v1244
        %v1246 = vpop.f32.mrf.mxu0
        %v1247 = vadd.f32 %v1090, %v1246
        %1248 = vmatprep.mubr.f32.mxu0 0.0
        %1249 = vmatmul.mubr.f32.gmra.mxu0 %v1012
        %v1250 = vpop.f32.mrf.mxu0
        %v1251 = vadd.f32 %v1095, %v1250
        %v1252 = vpop.f32.mrf.mxu0
        %v1253 = vadd.f32 %v1095, %v1252
        %1254 = vmatprep.mubr.f32.mxu0 0.0
        %1255 = vmatmul.mubr.f32.gmra.mxu0 %v1013
        %v1256 = vpop.f32.mrf.mxu0
        %v1257 = vadd.f32 %v1100, %v1256
        %v1258 = vpop.f32.mrf.mxu0
        %v1259 = vadd.f32 %v1100, %v1258
        %1260 = vmatprep.mubr.f32.mxu0 0.0
        %1261 = vmatmul.mubr.f32.gmra.mxu0 %v1014
        %v1262 = vpop.f32.mrf.mxu0
        %v1263 = vadd.f32 %v1105, %v1262
        %v1264 = vpop.f32.mrf.mxu0
        %v1265 = vadd.f32 %v1105, %v1264
        %1266 = vmatprep.mubr.f32.mxu0 0.0
        %1267 = vmatmul.mubr.f32.gmra.mxu0 %v1015
        %v1268 = vpop.f32.mrf.mxu0
        %v1269 = vadd.f32 %v1110, %v1268
        %v1270 = vpop.f32.mrf.mxu0
        %v1271 = vadd.f32 %v1110, %v1270
        %1272 = vdwg.mxu0
        %v1273 = vmax.f32 %v1179, 0.0
        %v1274 = vmax.f32 %v1181, 0.0
        %v1275 = vmax.f32 %v1185, 0.0
        %v1276 = vmax.f32 %v1187, 0.0
        %v1277 = vmax.f32 %v1191, 0.0
        %v1278 = vmax.f32 %v1193, 0.0
        %v1279 = vmax.f32 %v1197, 0.0
        %v1280 = vmax.f32 %v1199, 0.0
        %v1281 = vmax.f32 %v1203, 0.0
        %v1282 = vmax.f32 %v1205, 0.0
        %v1283 = vmax.f32 %v1209, 0.0
        %v1284 = vmax.f32 %v1211, 0.0
        %v1285 = vmax.f32 %v1215, 0.0
        %v1286 = vmax.f32 %v1217, 0.0
        %v1287 = vmax.f32 %v1221, 0.0
        %v1288 = vmax.f32 %v1223, 0.0
        %v1289 = vmax.f32 %v1227, 0.0
        %v1290 = vmax.f32 %v1229, 0.0
        %v1291 = vmax.f32 %v1233, 0.0
        %v1292 = vmax.f32 %v1235, 0.0
        %v1293 = vmax.f32 %v1239, 0.0
        %v1294 = vmax.f32 %v1241, 0.0
        %v1295 = vmax.f32 %v1245, 0.0
        %v1296 = vmax.f32 %v1247, 0.0
        %v1297 = vmax.f32 %v1251, 0.0
        %v1298 = vmax.f32 %v1253, 0.0
        %v1299 = vmax.f32 %v1257, 0.0
        %v1300 = vmax.f32 %v1259, 0.0
        %v1301 = vmax.f32 %v1263, 0.0
        %v1302 = vmax.f32 %v1265, 0.0
        %v1303 = vmax.f32 %v1269, 0.0
        %v1304 = vmax.f32 %v1271, 0.0
        %v1305 = vld [vmem:[%s5] sm:$0x7]
        %v1306 = vld [vmem:[#allocation2] sm:$0x7]
        %1308 = vset.pattern.permute.xlu0 0
        %1309 = vperm.xlu0 %1308, %v1306
        %v1310 = vpop.permute.xlu0 %1309
        %1312 = vmatprep.subr.mxu0 %v1304
        %1313 = vmatpush1.msra.mxu0 %v1303
        %1314 = vmatprep.subr.mxu0 %v1302
        %1315 = vmatpush1.msra.mxu0 %v1301
        %1316 = vmatprep.subr.mxu0 %v1300
        %1317 = vmatpush1.msra.mxu0 %v1299
        %1318 = vmatprep.subr.mxu0 %v1298
        %1319 = vmatpush1.msra.mxu0 %v1297
        %1320 = vmatprep.subr.mxu0 %v1296
        %1321 = vmatpush1.msra.mxu0 %v1295
        %1322 = vmatprep.subr.mxu0 %v1294
        %1323 = vmatpush1.msra.mxu0 %v1293
        %1324 = vmatprep.subr.mxu0 %v1292
        %1325 = vmatpush1.msra.mxu0 %v1291
        %1326 = vmatprep.subr.mxu0 %v1290
        %1327 = vmatpush1.msra.mxu0 %v1289
        %1328 = vmatprep.subr.mxu0 %v1288
        %1329 = vmatpush1.msra.mxu0 %v1287
        %1330 = vmatprep.subr.mxu0 %v1286
        %1331 = vmatpush1.msra.mxu0 %v1285
        %1332 = vmatprep.subr.mxu0 %v1284
        %1333 = vmatpush1.msra.mxu0 %v1283
        %1334 = vmatprep.subr.mxu0 %v1282
        %1335 = vmatpush1.msra.mxu0 %v1281
        %1336 = vmatprep.subr.mxu0 %v1280
        %1337 = vmatpush1.msra.mxu0 %v1279
        %1338 = vmatprep.subr.mxu0 %v1278
        %1339 = vmatpush1.msra.mxu0 %v1277
        %1340 = vmatprep.subr.mxu0 %v1276
        %1341 = vmatpush1.msra.mxu0 %v1275
        %1342 = vmatprep.subr.mxu0 %v1274
        %1343 = vmatpush1.msra.mxu0 %v1273
        %1344 = vmatprep.subr.mxu0 0.0
        %1345 = vmatpush2.msra.mxu0 0.0
        %1346 = vmatprep.subr.mxu0 0.0
        %1347 = vmatpush2.msra.mxu0 0.0
        %1348 = vmatprep.subr.mxu0 0.0
        %1349 = vmatpush2.msra.mxu0 0.0
        %1350 = vmatprep.subr.mxu0 0.0
        %1351 = vmatpush2.msra.mxu0 0.0
        %1352 = vmatprep.subr.mxu0 0.0
        %1353 = vmatpush2.msra.mxu0 0.0
        %1354 = vmatprep.subr.mxu0 0.0
        %1355 = vmatpush2.msra.mxu0 0.0
        %1356 = vmatprep.subr.mxu0 0.0
        %1357 = vmatpush2.msra.mxu0 0.0
        %1358 = vmatprep.subr.mxu0 0.0
        %1359 = vmatpush2.msra.mxu0 0.0
        %1360 = vmatprep.subr.mxu0 0.0
        %1361 = vmatpush2.msra.mxu0 0.0
        %1362 = vmatprep.subr.mxu0 0.0
        %1363 = vmatpush2.msra.mxu0 0.0
        %1364 = vmatprep.subr.mxu0 0.0
        %1365 = vmatpush2.msra.mxu0 0.0
        %1366 = vmatprep.subr.mxu0 0.0
        %1367 = vmatpush2.msra.mxu0 0.0
        %1368 = vmatprep.subr.mxu0 0.0
        %1369 = vmatpush2.msra.mxu0 0.0
        %1370 = vmatprep.subr.mxu0 0.0
        %1371 = vmatpush2.msra.mxu0 0.0
        %1372 = vmatprep.subr.mxu0 0.0
        %1373 = vmatpush2.msra.mxu0 0.0
        %1374 = vmatprep.subr.mxu0 0.0
        %1375 = vmatpush2.msra.mxu0 0.0
        %1376 = vmatprep.mubr.f32.mxu0 0.0
        %1377 = vmatmul.mubr.f32.gmra.mxu0 %v1305
        %v1378 = vpop.f32.mrf.mxu0
        %v1379 = vadd.f32 %v1310, %v1378
        %v1380 = vpop.f32.mrf.mxu0
        %v1381 = vadd.f32 %v1310, %v1380
        %1382 = vdwg.mxu0
        %v1383 = vld [vmem:[%s8] sm:$0xff]
        %v1384 = vld [vmem:[%s8 + $0x8] sm:$0xff]
        %v1385 = vld [vmem:[%s8 + $0x10] sm:$0xff]
        %v1386 = vld [vmem:[%s8 + $0x18] sm:$0xff]
        %v1387 = vld [vmem:[%s8 + $0x20] sm:$0xff]
        %v1388 = vld [vmem:[%s8 + $0x28] sm:$0xff]
        %v1389 = vld [vmem:[%s8 + $0x30] sm:$0xff]
        %v1390 = vld [vmem:[%s8 + $0x38] sm:$0xff]
        %v1391 = vld [vmem:[%s8 + $0x40] sm:$0xff]
        %v1392 = vld [vmem:[%s8 + $0x48] sm:$0xff]
        %v1393 = vld [vmem:[%s8 + $0x50] sm:$0xff]
        %v1394 = vld [vmem:[%s8 + $0x58] sm:$0xff]
        %v1395 = vld [vmem:[%s8 + $0x60] sm:$0xff]
        %v1396 = vld [vmem:[%s8 + $0x68] sm:$0xff]
        %v1397 = vld [vmem:[%s8 + $0x70] sm:$0xff]
        %v1398 = vld [vmem:[%s8 + $0x78] sm:$0xff]
        %v1399 = vld [vmem:[%s535] sm:$0xff]
        %v1400 = vld [vmem:[%s535 + $0x8] sm:$0xff]
        %v1401 = vld [vmem:[%s535 + $0x10] sm:$0xff]
        %v1402 = vld [vmem:[%s535 + $0x18] sm:$0xff]
        %v1403 = vld [vmem:[%s535 + $0x20] sm:$0xff]
        %v1404 = vld [vmem:[%s535 + $0x28] sm:$0xff]
        %v1405 = vld [vmem:[%s535 + $0x30] sm:$0xff]
        %v1406 = vld [vmem:[%s535 + $0x38] sm:$0xff]
        %v1407 = vld [vmem:[%s535 + $0x40] sm:$0xff]
        %v1408 = vld [vmem:[%s535 + $0x48] sm:$0xff]
        %v1409 = vld [vmem:[%s535 + $0x50] sm:$0xff]
        %v1410 = vld [vmem:[%s535 + $0x58] sm:$0xff]
        %v1411 = vld [vmem:[%s535 + $0x60] sm:$0xff]
        %v1412 = vld [vmem:[%s535 + $0x68] sm:$0xff]
        %v1413 = vld [vmem:[%s535 + $0x70] sm:$0xff]
        %v1414 = vld [vmem:[%s535 + $0x78] sm:$0xff]
        %1416 = vset.pattern.permute.xlu0 0
        %1417 = vperm.xlu0 %1416, %v1383
        %v1418 = vpop.permute.xlu0 %1417
        %1421 = vset.pattern.permute.xlu0 0
        %1422 = vperm.xlu0 %1421, %v1384
        %v1423 = vpop.permute.xlu0 %1422
        %1426 = vset.pattern.permute.xlu0 0
        %1427 = vperm.xlu0 %1426, %v1385
        %v1428 = vpop.permute.xlu0 %1427
        %1431 = vset.pattern.permute.xlu0 0
        %1432 = vperm.xlu0 %1431, %v1386
        %v1433 = vpop.permute.xlu0 %1432
        %1436 = vset.pattern.permute.xlu0 0
        %1437 = vperm.xlu0 %1436, %v1387
        %v1438 = vpop.permute.xlu0 %1437
        %1441 = vset.pattern.permute.xlu0 0
        %1442 = vperm.xlu0 %1441, %v1388
        %v1443 = vpop.permute.xlu0 %1442
        %1446 = vset.pattern.permute.xlu0 0
        %1447 = vperm.xlu0 %1446, %v1389
        %v1448 = vpop.permute.xlu0 %1447
        %1451 = vset.pattern.permute.xlu0 0
        %1452 = vperm.xlu0 %1451, %v1390
        %v1453 = vpop.permute.xlu0 %1452
        %1456 = vset.pattern.permute.xlu0 0
        %1457 = vperm.xlu0 %1456, %v1391
        %v1458 = vpop.permute.xlu0 %1457
        %1461 = vset.pattern.permute.xlu0 0
        %1462 = vperm.xlu0 %1461, %v1392
        %v1463 = vpop.permute.xlu0 %1462
        %1466 = vset.pattern.permute.xlu0 0
        %1467 = vperm.xlu0 %1466, %v1393
        %v1468 = vpop.permute.xlu0 %1467
        %1471 = vset.pattern.permute.xlu0 0
        %1472 = vperm.xlu0 %1471, %v1394
        %v1473 = vpop.permute.xlu0 %1472
        %1476 = vset.pattern.permute.xlu0 0
        %1477 = vperm.xlu0 %1476, %v1395
        %v1478 = vpop.permute.xlu0 %1477
        %1481 = vset.pattern.permute.xlu0 0
        %1482 = vperm.xlu0 %1481, %v1396
        %v1483 = vpop.permute.xlu0 %1482
        %1486 = vset.pattern.permute.xlu0 0
        %1487 = vperm.xlu0 %1486, %v1397
        %v1488 = vpop.permute.xlu0 %1487
        %1491 = vset.pattern.permute.xlu0 0
        %1492 = vperm.xlu0 %1491, %v1398
        %v1493 = vpop.permute.xlu0 %1492
        %v1495 = vlaneseq
        %v1496 = vshrl.u32 %v1495, 7
        %v1497 = vsub.s32 0, %v1496
        %v1498 = vrot.slane %v1379, %v1497
        %v1499 = vlaneseq
        %v1500 = vshrl.u32 %v1499, 7
        %v1501 = vsub.s32 0, %v1500
        %v1502 = vrot.slane %v1381, %v1501
        %v1503 = vmul.f32 %v1418, %v1498
        %v1504 = vmul.f32 %v1418, %v1502
        %v1505 = vmul.f32 %v1423, %v1498
        %v1506 = vmul.f32 %v1423, %v1502
        %v1507 = vmul.f32 %v1428, %v1498
        %v1508 = vmul.f32 %v1428, %v1502
        %v1509 = vmul.f32 %v1433, %v1498
        %v1510 = vmul.f32 %v1433, %v1502
        %v1511 = vmul.f32 %v1438, %v1498
        %v1512 = vmul.f32 %v1438, %v1502
        %v1513 = vmul.f32 %v1443, %v1498
        %v1514 = vmul.f32 %v1443, %v1502
        %v1515 = vmul.f32 %v1448, %v1498
        %v1516 = vmul.f32 %v1448, %v1502
        %v1517 = vmul.f32 %v1453, %v1498
        %v1518 = vmul.f32 %v1453, %v1502
        %v1519 = vmul.f32 %v1458, %v1498
        %v1520 = vmul.f32 %v1458, %v1502
        %v1521 = vmul.f32 %v1463, %v1498
        %v1522 = vmul.f32 %v1463, %v1502
        %v1523 = vmul.f32 %v1468, %v1498
        %v1524 = vmul.f32 %v1468, %v1502
        %v1525 = vmul.f32 %v1473, %v1498
        %v1526 = vmul.f32 %v1473, %v1502
        %v1527 = vmul.f32 %v1478, %v1498
        %v1528 = vmul.f32 %v1478, %v1502
        %v1529 = vmul.f32 %v1483, %v1498
        %v1530 = vmul.f32 %v1483, %v1502
        %v1531 = vmul.f32 %v1488, %v1498
        %v1532 = vmul.f32 %v1488, %v1502
        %v1533 = vmul.f32 %v1493, %v1498
        %v1534 = vmul.f32 %v1493, %v1502
        %1536 = vset.pattern.permute.xlu0 0
        %1537 = vperm.xlu0 %1536, %v1399
        %v1538 = vpop.permute.xlu0 %1537
        %1541 = vset.pattern.permute.xlu0 0
        %1542 = vperm.xlu0 %1541, %v1400
        %v1543 = vpop.permute.xlu0 %1542
        %1546 = vset.pattern.permute.xlu0 0
        %1547 = vperm.xlu0 %1546, %v1401
        %v1548 = vpop.permute.xlu0 %1547
        %1551 = vset.pattern.permute.xlu0 0
        %1552 = vperm.xlu0 %1551, %v1402
        %v1553 = vpop.permute.xlu0 %1552
        %1556 = vset.pattern.permute.xlu0 0
        %1557 = vperm.xlu0 %1556, %v1403
        %v1558 = vpop.permute.xlu0 %1557
        %1561 = vset.pattern.permute.xlu0 0
        %1562 = vperm.xlu0 %1561, %v1404
        %v1563 = vpop.permute.xlu0 %1562
        %1566 = vset.pattern.permute.xlu0 0
        %1567 = vperm.xlu0 %1566, %v1405
        %v1568 = vpop.permute.xlu0 %1567
        %1571 = vset.pattern.permute.xlu0 0
        %1572 = vperm.xlu0 %1571, %v1406
        %v1573 = vpop.permute.xlu0 %1572
        %1576 = vset.pattern.permute.xlu0 0
        %1577 = vperm.xlu0 %1576, %v1407
        %v1578 = vpop.permute.xlu0 %1577
        %1581 = vset.pattern.permute.xlu0 0
        %1582 = vperm.xlu0 %1581, %v1408
        %v1583 = vpop.permute.xlu0 %1582
        %1586 = vset.pattern.permute.xlu0 0
        %1587 = vperm.xlu0 %1586, %v1409
        %v1588 = vpop.permute.xlu0 %1587
        %1591 = vset.pattern.permute.xlu0 0
        %1592 = vperm.xlu0 %1591, %v1410
        %v1593 = vpop.permute.xlu0 %1592
        %1596 = vset.pattern.permute.xlu0 0
        %1597 = vperm.xlu0 %1596, %v1411
        %v1598 = vpop.permute.xlu0 %1597
        %1601 = vset.pattern.permute.xlu0 0
        %1602 = vperm.xlu0 %1601, %v1412
        %v1603 = vpop.permute.xlu0 %1602
        %1606 = vset.pattern.permute.xlu0 0
        %1607 = vperm.xlu0 %1606, %v1413
        %v1608 = vpop.permute.xlu0 %1607
        %1611 = vset.pattern.permute.xlu0 0
        %1612 = vperm.xlu0 %1611, %v1414
        %v1613 = vpop.permute.xlu0 %1612
        %v1615 = vadd.f32 %v1538, %v1503
        %v1616 = vadd.f32 %v1538, %v1504
        %v1617 = vadd.f32 %v1543, %v1505
        %v1618 = vadd.f32 %v1543, %v1506
        %v1619 = vadd.f32 %v1548, %v1507
        %v1620 = vadd.f32 %v1548, %v1508
        %v1621 = vadd.f32 %v1553, %v1509
        %v1622 = vadd.f32 %v1553, %v1510
        %v1623 = vadd.f32 %v1558, %v1511
        %v1624 = vadd.f32 %v1558, %v1512
        %v1625 = vadd.f32 %v1563, %v1513
        %v1626 = vadd.f32 %v1563, %v1514
        %v1627 = vadd.f32 %v1568, %v1515
        %v1628 = vadd.f32 %v1568, %v1516
        %v1629 = vadd.f32 %v1573, %v1517
        %v1630 = vadd.f32 %v1573, %v1518
        %v1631 = vadd.f32 %v1578, %v1519
        %v1632 = vadd.f32 %v1578, %v1520
        %v1633 = vadd.f32 %v1583, %v1521
        %v1634 = vadd.f32 %v1583, %v1522
        %v1635 = vadd.f32 %v1588, %v1523
        %v1636 = vadd.f32 %v1588, %v1524
        %v1637 = vadd.f32 %v1593, %v1525
        %v1638 = vadd.f32 %v1593, %v1526
        %v1639 = vadd.f32 %v1598, %v1527
        %v1640 = vadd.f32 %v1598, %v1528
        %v1641 = vadd.f32 %v1603, %v1529
        %v1642 = vadd.f32 %v1603, %v1530
        %v1643 = vadd.f32 %v1608, %v1531
        %v1644 = vadd.f32 %v1608, %v1532
        %v1645 = vadd.f32 %v1613, %v1533
        %v1646 = vadd.f32 %v1613, %v1534
        %1647 = vset.pattern.permute.xlu0 1
        %1648 = vperm.xlu0 %1647, %v1383
        %v1649 = vpop.permute.xlu0 %1648
        %1651 = vset.pattern.permute.xlu0 1
        %1652 = vperm.xlu0 %1651, %v1384
        %v1653 = vpop.permute.xlu0 %1652
        %1655 = vset.pattern.permute.xlu0 1
        %1656 = vperm.xlu0 %1655, %v1385
        %v1657 = vpop.permute.xlu0 %1656
        %1659 = vset.pattern.permute.xlu0 1
        %1660 = vperm.xlu0 %1659, %v1386
        %v1661 = vpop.permute.xlu0 %1660
        %1663 = vset.pattern.permute.xlu0 1
        %1664 = vperm.xlu0 %1663, %v1387
        %v1665 = vpop.permute.xlu0 %1664
        %1667 = vset.pattern.permute.xlu0 1
        %1668 = vperm.xlu0 %1667, %v1388
        %v1669 = vpop.permute.xlu0 %1668
        %1671 = vset.pattern.permute.xlu0 1
        %1672 = vperm.xlu0 %1671, %v1389
        %v1673 = vpop.permute.xlu0 %1672
        %1675 = vset.pattern.permute.xlu0 1
        %1676 = vperm.xlu0 %1675, %v1390
        %v1677 = vpop.permute.xlu0 %1676
        %1679 = vset.pattern.permute.xlu0 1
        %1680 = vperm.xlu0 %1679, %v1391
        %v1681 = vpop.permute.xlu0 %1680
        %1683 = vset.pattern.permute.xlu0 1
        %1684 = vperm.xlu0 %1683, %v1392
        %v1685 = vpop.permute.xlu0 %1684
        %1687 = vset.pattern.permute.xlu0 1
        %1688 = vperm.xlu0 %1687, %v1393
        %v1689 = vpop.permute.xlu0 %1688
        %1691 = vset.pattern.permute.xlu0 1
        %1692 = vperm.xlu0 %1691, %v1394
        %v1693 = vpop.permute.xlu0 %1692
        %1695 = vset.pattern.permute.xlu0 1
        %1696 = vperm.xlu0 %1695, %v1395
        %v1697 = vpop.permute.xlu0 %1696
        %1699 = vset.pattern.permute.xlu0 1
        %1700 = vperm.xlu0 %1699, %v1396
        %v1701 = vpop.permute.xlu0 %1700
        %1703 = vset.pattern.permute.xlu0 1
        %1704 = vperm.xlu0 %1703, %v1397
        %v1705 = vpop.permute.xlu0 %1704
        %1707 = vset.pattern.permute.xlu0 1
        %1708 = vperm.xlu0 %1707, %v1398
        %v1709 = vpop.permute.xlu0 %1708
        %v1711 = vlaneseq
        %v1712 = vshrl.u32 %v1711, 7
        %v1713 = vsub.s32 1, %v1712
        %v1714 = vrot.slane %v1379, %v1713
        %v1715 = vlaneseq
        %v1716 = vshrl.u32 %v1715, 7
        %v1717 = vsub.s32 1, %v1716
        %v1718 = vrot.slane %v1381, %v1717
        %v1719 = vmul.f32 %v1649, %v1714
        %v1720 = vmul.f32 %v1649, %v1718
        %v1721 = vmul.f32 %v1653, %v1714
        %v1722 = vmul.f32 %v1653, %v1718
        %v1723 = vmul.f32 %v1657, %v1714
        %v1724 = vmul.f32 %v1657, %v1718
        %v1725 = vmul.f32 %v1661, %v1714
        %v1726 = vmul.f32 %v1661, %v1718
        %v1727 = vmul.f32 %v1665, %v1714
        %v1728 = vmul.f32 %v1665, %v1718
        %v1729 = vmul.f32 %v1669, %v1714
        %v1730 = vmul.f32 %v1669, %v1718
        %v1731 = vmul.f32 %v1673, %v1714
        %v1732 = vmul.f32 %v1673, %v1718
        %v1733 = vmul.f32 %v1677, %v1714
        %v1734 = vmul.f32 %v1677, %v1718
        %v1735 = vmul.f32 %v1681, %v1714
        %v1736 = vmul.f32 %v1681, %v1718
        %v1737 = vmul.f32 %v1685, %v1714
        %v1738 = vmul.f32 %v1685, %v1718
        %v1739 = vmul.f32 %v1689, %v1714
        %v1740 = vmul.f32 %v1689, %v1718
        %v1741 = vmul.f32 %v1693, %v1714
        %v1742 = vmul.f32 %v1693, %v1718
        %v1743 = vmul.f32 %v1697, %v1714
        %v1744 = vmul.f32 %v1697, %v1718
        %v1745 = vmul.f32 %v1701, %v1714
        %v1746 = vmul.f32 %v1701, %v1718
        %v1747 = vmul.f32 %v1705, %v1714
        %v1748 = vmul.f32 %v1705, %v1718
        %v1749 = vmul.f32 %v1709, %v1714
        %v1750 = vmul.f32 %v1709, %v1718
        %v1751 = vadd.f32 %v1615, %v1719
        %v1752 = vadd.f32 %v1616, %v1720
        %v1753 = vadd.f32 %v1617, %v1721
        %v1754 = vadd.f32 %v1618, %v1722
        %v1755 = vadd.f32 %v1619, %v1723
        %v1756 = vadd.f32 %v1620, %v1724
        %v1757 = vadd.f32 %v1621, %v1725
        %v1758 = vadd.f32 %v1622, %v1726
        %v1759 = vadd.f32 %v1623, %v1727
        %v1760 = vadd.f32 %v1624, %v1728
        %v1761 = vadd.f32 %v1625, %v1729
        %v1762 = vadd.f32 %v1626, %v1730
        %v1763 = vadd.f32 %v1627, %v1731
        %v1764 = vadd.f32 %v1628, %v1732
        %v1765 = vadd.f32 %v1629, %v1733
        %v1766 = vadd.f32 %v1630, %v1734
        %v1767 = vadd.f32 %v1631, %v1735
        %v1768 = vadd.f32 %v1632, %v1736
        %v1769 = vadd.f32 %v1633, %v1737
        %v1770 = vadd.f32 %v1634, %v1738
        %v1771 = vadd.f32 %v1635, %v1739
        %v1772 = vadd.f32 %v1636, %v1740
        %v1773 = vadd.f32 %v1637, %v1741
        %v1774 = vadd.f32 %v1638, %v1742
        %v1775 = vadd.f32 %v1639, %v1743
        %v1776 = vadd.f32 %v1640, %v1744
        %v1777 = vadd.f32 %v1641, %v1745
        %v1778 = vadd.f32 %v1642, %v1746
        %v1779 = vadd.f32 %v1643, %v1747
        %v1780 = vadd.f32 %v1644, %v1748
        %v1781 = vadd.f32 %v1645, %v1749
        %v1782 = vadd.f32 %v1646, %v1750
        %1783 = vset.pattern.permute.xlu0 2
        %1784 = vperm.xlu0 %1783, %v1383
        %v1785 = vpop.permute.xlu0 %1784
        %1787 = vset.pattern.permute.xlu0 2
        %1788 = vperm.xlu0 %1787, %v1384
        %v1789 = vpop.permute.xlu0 %1788
        %1791 = vset.pattern.permute.xlu0 2
        %1792 = vperm.xlu0 %1791, %v1385
        %v1793 = vpop.permute.xlu0 %1792
        %1795 = vset.pattern.permute.xlu0 2
        %1796 = vperm.xlu0 %1795, %v1386
        %v1797 = vpop.permute.xlu0 %1796
        %1799 = vset.pattern.permute.xlu0 2
        %1800 = vperm.xlu0 %1799, %v1387
        %v1801 = vpop.permute.xlu0 %1800
        %1803 = vset.pattern.permute.xlu0 2
        %1804 = vperm.xlu0 %1803, %v1388
        %v1805 = vpop.permute.xlu0 %1804
        %1807 = vset.pattern.permute.xlu0 2
        %1808 = vperm.xlu0 %1807, %v1389
        %v1809 = vpop.permute.xlu0 %1808
        %1811 = vset.pattern.permute.xlu0 2
        %1812 = vperm.xlu0 %1811, %v1390
        %v1813 = vpop.permute.xlu0 %1812
        %1815 = vset.pattern.permute.xlu0 2
        %1816 = vperm.xlu0 %1815, %v1391
        %v1817 = vpop.permute.xlu0 %1816
        %1819 = vset.pattern.permute.xlu0 2
        %1820 = vperm.xlu0 %1819, %v1392
        %v1821 = vpop.permute.xlu0 %1820
        %1823 = vset.pattern.permute.xlu0 2
        %1824 = vperm.xlu0 %1823, %v1393
        %v1825 = vpop.permute.xlu0 %1824
        %1827 = vset.pattern.permute.xlu0 2
        %1828 = vperm.xlu0 %1827, %v1394
        %v1829 = vpop.permute.xlu0 %1828
        %1831 = vset.pattern.permute.xlu0 2
        %1832 = vperm.xlu0 %1831, %v1395
        %v1833 = vpop.permute.xlu0 %1832
        %1835 = vset.pattern.permute.xlu0 2
        %1836 = vperm.xlu0 %1835, %v1396
        %v1837 = vpop.permute.xlu0 %1836
        %1839 = vset.pattern.permute.xlu0 2
        %1840 = vperm.xlu0 %1839, %v1397
        %v1841 = vpop.permute.xlu0 %1840
        %1843 = vset.pattern.permute.xlu0 2
        %1844 = vperm.xlu0 %1843, %v1398
        %v1845 = vpop.permute.xlu0 %1844
        %v1847 = vlaneseq
        %v1848 = vshrl.u32 %v1847, 7
        %v1849 = vsub.s32 2, %v1848
        %v1850 = vrot.slane %v1379, %v1849
        %v1851 = vlaneseq
        %v1852 = vshrl.u32 %v1851, 7
        %v1853 = vsub.s32 2, %v1852
        %v1854 = vrot.slane %v1381, %v1853
        %v1855 = vmul.f32 %v1785, %v1850
        %v1856 = vmul.f32 %v1785, %v1854
        %v1857 = vmul.f32 %v1789, %v1850
        %v1858 = vmul.f32 %v1789, %v1854
        %v1859 = vmul.f32 %v1793, %v1850
        %v1860 = vmul.f32 %v1793, %v1854
        %v1861 = vmul.f32 %v1797, %v1850
        %v1862 = vmul.f32 %v1797, %v1854
        %v1863 = vmul.f32 %v1801, %v1850
        %v1864 = vmul.f32 %v1801, %v1854
        %v1865 = vmul.f32 %v1805, %v1850
        %v1866 = vmul.f32 %v1805, %v1854
        %v1867 = vmul.f32 %v1809, %v1850
        %v1868 = vmul.f32 %v1809, %v1854
        %v1869 = vmul.f32 %v1813, %v1850
        %v1870 = vmul.f32 %v1813, %v1854
        %v1871 = vmul.f32 %v1817, %v1850
        %v1872 = vmul.f32 %v1817, %v1854
        %v1873 = vmul.f32 %v1821, %v1850
        %v1874 = vmul.f32 %v1821, %v1854
        %v1875 = vmul.f32 %v1825, %v1850
        %v1876 = vmul.f32 %v1825, %v1854
        %v1877 = vmul.f32 %v1829, %v1850
        %v1878 = vmul.f32 %v1829, %v1854
        %v1879 = vmul.f32 %v1833, %v1850
        %v1880 = vmul.f32 %v1833, %v1854
        %v1881 = vmul.f32 %v1837, %v1850
        %v1882 = vmul.f32 %v1837, %v1854
        %v1883 = vmul.f32 %v1841, %v1850
        %v1884 = vmul.f32 %v1841, %v1854
        %v1885 = vmul.f32 %v1845, %v1850
        %v1886 = vmul.f32 %v1845, %v1854
        %v1887 = vadd.f32 %v1751, %v1855
        %v1888 = vadd.f32 %v1752, %v1856
        %v1889 = vadd.f32 %v1753, %v1857
        %v1890 = vadd.f32 %v1754, %v1858
        %v1891 = vadd.f32 %v1755, %v1859
        %v1892 = vadd.f32 %v1756, %v1860
        %v1893 = vadd.f32 %v1757, %v1861
        %v1894 = vadd.f32 %v1758, %v1862
        %v1895 = vadd.f32 %v1759, %v1863
        %v1896 = vadd.f32 %v1760, %v1864
        %v1897 = vadd.f32 %v1761, %v1865
        %v1898 = vadd.f32 %v1762, %v1866
        %v1899 = vadd.f32 %v1763, %v1867
        %v1900 = vadd.f32 %v1764, %v1868
        %v1901 = vadd.f32 %v1765, %v1869
        %v1902 = vadd.f32 %v1766, %v1870
        %v1903 = vadd.f32 %v1767, %v1871
        %v1904 = vadd.f32 %v1768, %v1872
        %v1905 = vadd.f32 %v1769, %v1873
        %v1906 = vadd.f32 %v1770, %v1874
        %v1907 = vadd.f32 %v1771, %v1875
        %v1908 = vadd.f32 %v1772, %v1876
        %v1909 = vadd.f32 %v1773, %v1877
        %v1910 = vadd.f32 %v1774, %v1878
        %v1911 = vadd.f32 %v1775, %v1879
        %v1912 = vadd.f32 %v1776, %v1880
        %v1913 = vadd.f32 %v1777, %v1881
        %v1914 = vadd.f32 %v1778, %v1882
        %v1915 = vadd.f32 %v1779, %v1883
        %v1916 = vadd.f32 %v1780, %v1884
        %v1917 = vadd.f32 %v1781, %v1885
        %v1918 = vadd.f32 %v1782, %v1886
        %v1919 = vmax.f32 %v1887, 0.0
        %v1920 = vmax.f32 %v1888, 0.0
        %v1921 = vmax.f32 %v1889, 0.0
        %v1922 = vmax.f32 %v1890, 0.0
        %v1923 = vmax.f32 %v1891, 0.0
        %v1924 = vmax.f32 %v1892, 0.0
        %v1925 = vmax.f32 %v1893, 0.0
        %v1926 = vmax.f32 %v1894, 0.0
        %v1927 = vmax.f32 %v1895, 0.0
        %v1928 = vmax.f32 %v1896, 0.0
        %v1929 = vmax.f32 %v1897, 0.0
        %v1930 = vmax.f32 %v1898, 0.0
        %v1931 = vmax.f32 %v1899, 0.0
        %v1932 = vmax.f32 %v1900, 0.0
        %v1933 = vmax.f32 %v1901, 0.0
        %v1934 = vmax.f32 %v1902, 0.0
        %v1935 = vmax.f32 %v1903, 0.0
        %v1936 = vmax.f32 %v1904, 0.0
        %v1937 = vmax.f32 %v1905, 0.0
        %v1938 = vmax.f32 %v1906, 0.0
        %v1939 = vmax.f32 %v1907, 0.0
        %v1940 = vmax.f32 %v1908, 0.0
        %v1941 = vmax.f32 %v1909, 0.0
        %v1942 = vmax.f32 %v1910, 0.0
        %v1943 = vmax.f32 %v1911, 0.0
        %v1944 = vmax.f32 %v1912, 0.0
        %v1945 = vmax.f32 %v1913, 0.0
        %v1946 = vmax.f32 %v1914, 0.0
        %v1947 = vmax.f32 %v1915, 0.0
        %v1948 = vmax.f32 %v1916, 0.0
        %v1949 = vmax.f32 %v1917, 0.0
        %v1950 = vmax.f32 %v1918, 0.0
        %v1951 = vld [vmem:[%s9] sm:$0xff]
        %v1952 = vld [vmem:[%s9 + $0x8] sm:$0xff]
        %v1953 = vld [vmem:[%s9 + $0x10] sm:$0xff]
        %v1954 = vld [vmem:[%s9 + $0x18] sm:$0xff]
        %v1955 = vld [vmem:[%s9 + $0x20] sm:$0xff]
        %v1956 = vld [vmem:[%s9 + $0x28] sm:$0xff]
        %v1957 = vld [vmem:[%s9 + $0x30] sm:$0xff]
        %v1958 = vld [vmem:[%s9 + $0x38] sm:$0xff]
        %v1959 = vld [vmem:[%s9 + $0x40] sm:$0xff]
        %v1960 = vld [vmem:[%s9 + $0x48] sm:$0xff]
        %v1961 = vld [vmem:[%s9 + $0x50] sm:$0xff]
        %v1962 = vld [vmem:[%s9 + $0x58] sm:$0xff]
        %v1963 = vld [vmem:[%s9 + $0x60] sm:$0xff]
        %v1964 = vld [vmem:[%s9 + $0x68] sm:$0xff]
        %v1965 = vld [vmem:[%s9 + $0x70] sm:$0xff]
        %v1966 = vld [vmem:[%s9 + $0x78] sm:$0xff]
        %v1967 = vld [vmem:[#allocation4] sm:$0xff]
        %v1968 = vld [vmem:[#allocation4 + $0x8] sm:$0xff]
        %v1969 = vld [vmem:[#allocation4 + $0x10] sm:$0xff]
        %v1970 = vld [vmem:[#allocation4 + $0x18] sm:$0xff]
        %v1971 = vld [vmem:[#allocation4 + $0x20] sm:$0xff]
        %v1972 = vld [vmem:[#allocation4 + $0x28] sm:$0xff]
        %v1973 = vld [vmem:[#allocation4 + $0x30] sm:$0xff]
        %v1974 = vld [vmem:[#allocation4 + $0x38] sm:$0xff]
        %v1975 = vld [vmem:[#allocation4 + $0x40] sm:$0xff]
        %v1976 = vld [vmem:[#allocation4 + $0x48] sm:$0xff]
        %v1977 = vld [vmem:[#allocation4 + $0x50] sm:$0xff]
        %v1978 = vld [vmem:[#allocation4 + $0x58] sm:$0xff]
        %v1979 = vld [vmem:[#allocation4 + $0x60] sm:$0xff]
        %v1980 = vld [vmem:[#allocation4 + $0x68] sm:$0xff]
        %v1981 = vld [vmem:[#allocation4 + $0x70] sm:$0xff]
        %v1982 = vld [vmem:[#allocation4 + $0x78] sm:$0xff]
        %1984 = vset.pattern.permute.xlu0 0
        %1985 = vperm.xlu0 %1984, %v1967
        %v1986 = vpop.permute.xlu0 %1985
        %1989 = vset.pattern.permute.xlu0 0
        %1990 = vperm.xlu0 %1989, %v1968
        %v1991 = vpop.permute.xlu0 %1990
        %1994 = vset.pattern.permute.xlu0 0
        %1995 = vperm.xlu0 %1994, %v1969
        %v1996 = vpop.permute.xlu0 %1995
        %1999 = vset.pattern.permute.xlu0 0
        %2000 = vperm.xlu0 %1999, %v1970
        %v2001 = vpop.permute.xlu0 %2000
        %2004 = vset.pattern.permute.xlu0 0
        %2005 = vperm.xlu0 %2004, %v1971
        %v2006 = vpop.permute.xlu0 %2005
        %2009 = vset.pattern.permute.xlu0 0
        %2010 = vperm.xlu0 %2009, %v1972
        %v2011 = vpop.permute.xlu0 %2010
        %2014 = vset.pattern.permute.xlu0 0
        %2015 = vperm.xlu0 %2014, %v1973
        %v2016 = vpop.permute.xlu0 %2015
        %2019 = vset.pattern.permute.xlu0 0
        %2020 = vperm.xlu0 %2019, %v1974
        %v2021 = vpop.permute.xlu0 %2020
        %2024 = vset.pattern.permute.xlu0 0
        %2025 = vperm.xlu0 %2024, %v1975
        %v2026 = vpop.permute.xlu0 %2025
        %2029 = vset.pattern.permute.xlu0 0
        %2030 = vperm.xlu0 %2029, %v1976
        %v2031 = vpop.permute.xlu0 %2030
        %2034 = vset.pattern.permute.xlu0 0
        %2035 = vperm.xlu0 %2034, %v1977
        %v2036 = vpop.permute.xlu0 %2035
        %2039 = vset.pattern.permute.xlu0 0
        %2040 = vperm.xlu0 %2039, %v1978
        %v2041 = vpop.permute.xlu0 %2040
        %2044 = vset.pattern.permute.xlu0 0
        %2045 = vperm.xlu0 %2044, %v1979
        %v2046 = vpop.permute.xlu0 %2045
        %2049 = vset.pattern.permute.xlu0 0
        %2050 = vperm.xlu0 %2049, %v1980
        %v2051 = vpop.permute.xlu0 %2050
        %2054 = vset.pattern.permute.xlu0 0
        %2055 = vperm.xlu0 %2054, %v1981
        %v2056 = vpop.permute.xlu0 %2055
        %2059 = vset.pattern.permute.xlu0 0
        %2060 = vperm.xlu0 %2059, %v1982
        %v2061 = vpop.permute.xlu0 %2060
        %2063 = vmatprep.subr.mxu0 %v1950
        %2064 = vmatpush1.msra.mxu0 %v1949
        %2065 = vmatprep.subr.mxu0 %v1948
        %2066 = vmatpush1.msra.mxu0 %v1947
        %2067 = vmatprep.subr.mxu0 %v1946
        %2068 = vmatpush1.msra.mxu0 %v1945
        %2069 = vmatprep.subr.mxu0 %v1944
        %2070 = vmatpush1.msra.mxu0 %v1943
        %2071 = vmatprep.subr.mxu0 %v1942
        %2072 = vmatpush1.msra.mxu0 %v1941
        %2073 = vmatprep.subr.mxu0 %v1940
        %2074 = vmatpush1.msra.mxu0 %v1939
        %2075 = vmatprep.subr.mxu0 %v1938
        %2076 = vmatpush1.msra.mxu0 %v1937
        %2077 = vmatprep.subr.mxu0 %v1936
        %2078 = vmatpush1.msra.mxu0 %v1935
        %2079 = vmatprep.subr.mxu0 %v1934
        %2080 = vmatpush1.msra.mxu0 %v1933
        %2081 = vmatprep.subr.mxu0 %v1932
        %2082 = vmatpush1.msra.mxu0 %v1931
        %2083 = vmatprep.subr.mxu0 %v1930
        %2084 = vmatpush1.msra.mxu0 %v1929
        %2085 = vmatprep.subr.mxu0 %v1928
        %2086 = vmatpush1.msra.mxu0 %v1927
        %2087 = vmatprep.subr.mxu0 %v1926
        %2088 = vmatpush1.msra.mxu0 %v1925
        %2089 = vmatprep.subr.mxu0 %v1924
        %2090 = vmatpush1.msra.mxu0 %v1923
        %2091 = vmatprep.subr.mxu0 %v1922
        %2092 = vmatpush1.msra.mxu0 %v1921
        %2093 = vmatprep.subr.mxu0 %v1920
        %2094 = vmatpush1.msra.mxu0 %v1919
        %2095 = vmatprep.subr.mxu0 0.0
        %2096 = vmatpush2.msra.mxu0 0.0
        %2097 = vmatprep.subr.mxu0 0.0
        %2098 = vmatpush2.msra.mxu0 0.0
        %2099 = vmatprep.subr.mxu0 0.0
        %2100 = vmatpush2.msra.mxu0 0.0
        %2101 = vmatprep.subr.mxu0 0.0
        %2102 = vmatpush2.msra.mxu0 0.0
        %2103 = vmatprep.subr.mxu0 0.0
        %2104 = vmatpush2.msra.mxu0 0.0
        %2105 = vmatprep.subr.mxu0 0.0
        %2106 = vmatpush2.msra.mxu0 0.0
        %2107 = vmatprep.subr.mxu0 0.0
        %2108 = vmatpush2.msra.mxu0 0.0
        %2109 = vmatprep.subr.mxu0 0.0
        %2110 = vmatpush2.msra.mxu0 0.0
        %2111 = vmatprep.subr.mxu0 0.0
        %2112 = vmatpush2.msra.mxu0 0.0
        %2113 = vmatprep.subr.mxu0 0.0
        %2114 = vmatpush2.msra.mxu0 0.0
        %2115 = vmatprep.subr.mxu0 0.0
        %2116 = vmatpush2.msra.mxu0 0.0
        %2117 = vmatprep.subr.mxu0 0.0
        %2118 = vmatpush2.msra.mxu0 0.0
        %2119 = vmatprep.subr.mxu0 0.0
        %2120 = vmatpush2.msra.mxu0 0.0
        %2121 = vmatprep.subr.mxu0 0.0
        %2122 = vmatpush2.msra.mxu0 0.0
        %2123 = vmatprep.subr.mxu0 0.0
        %2124 = vmatpush2.msra.mxu0 0.0
        %2125 = vmatprep.subr.mxu0 0.0
        %2126 = vmatpush2.msra.mxu0 0.0
        %2127 = vmatprep.mubr.f32.mxu0 0.0
        %2128 = vmatmul.mubr.f32.gmra.mxu0 %v1951
        %v2129 = vpop.f32.mrf.mxu0
        %v2130 = vadd.f32 %v1986, %v2129
        %v2131 = vpop.f32.mrf.mxu0
        %v2132 = vadd.f32 %v1986, %v2131
        %2133 = vmatprep.mubr.f32.mxu0 0.0
        %2134 = vmatmul.mubr.f32.gmra.mxu0 %v1952
        %v2135 = vpop.f32.mrf.mxu0
        %v2136 = vadd.f32 %v1991, %v2135
        %v2137 = vpop.f32.mrf.mxu0
        %v2138 = vadd.f32 %v1991, %v2137
        %2139 = vmatprep.mubr.f32.mxu0 0.0
        %2140 = vmatmul.mubr.f32.gmra.mxu0 %v1953
        %v2141 = vpop.f32.mrf.mxu0
        %v2142 = vadd.f32 %v1996, %v2141
        %v2143 = vpop.f32.mrf.mxu0
        %v2144 = vadd.f32 %v1996, %v2143
        %2145 = vmatprep.mubr.f32.mxu0 0.0
        %2146 = vmatmul.mubr.f32.gmra.mxu0 %v1954
        %v2147 = vpop.f32.mrf.mxu0
        %v2148 = vadd.f32 %v2001, %v2147
        %v2149 = vpop.f32.mrf.mxu0
        %v2150 = vadd.f32 %v2001, %v2149
        %2151 = vmatprep.mubr.f32.mxu0 0.0
        %2152 = vmatmul.mubr.f32.gmra.mxu0 %v1955
        %v2153 = vpop.f32.mrf.mxu0
        %v2154 = vadd.f32 %v2006, %v2153
        %v2155 = vpop.f32.mrf.mxu0
        %v2156 = vadd.f32 %v2006, %v2155
        %2157 = vmatprep.mubr.f32.mxu0 0.0
        %2158 = vmatmul.mubr.f32.gmra.mxu0 %v1956
        %v2159 = vpop.f32.mrf.mxu0
        %v2160 = vadd.f32 %v2011, %v2159
        %v2161 = vpop.f32.mrf.mxu0
        %v2162 = vadd.f32 %v2011, %v2161
        %2163 = vmatprep.mubr.f32.mxu0 0.0
        %2164 = vmatmul.mubr.f32.gmra.mxu0 %v1957
        %v2165 = vpop.f32.mrf.mxu0
        %v2166 = vadd.f32 %v2016, %v2165
        %v2167 = vpop.f32.mrf.mxu0
        %v2168 = vadd.f32 %v2016, %v2167
        %2169 = vmatprep.mubr.f32.mxu0 0.0
        %2170 = vmatmul.mubr.f32.gmra.mxu0 %v1958
        %v2171 = vpop.f32.mrf.mxu0
        %v2172 = vadd.f32 %v2021, %v2171
        %v2173 = vpop.f32.mrf.mxu0
        %v2174 = vadd.f32 %v2021, %v2173
        %2175 = vmatprep.mubr.f32.mxu0 0.0
        %2176 = vmatmul.mubr.f32.gmra.mxu0 %v1959
        %v2177 = vpop.f32.mrf.mxu0
        %v2178 = vadd.f32 %v2026, %v2177
        %v2179 = vpop.f32.mrf.mxu0
        %v2180 = vadd.f32 %v2026, %v2179
        %2181 = vmatprep.mubr.f32.mxu0 0.0
        %2182 = vmatmul.mubr.f32.gmra.mxu0 %v1960
        %v2183 = vpop.f32.mrf.mxu0
        %v2184 = vadd.f32 %v2031, %v2183
        %v2185 = vpop.f32.mrf.mxu0
        %v2186 = vadd.f32 %v2031, %v2185
        %2187 = vmatprep.mubr.f32.mxu0 0.0
        %2188 = vmatmul.mubr.f32.gmra.mxu0 %v1961
        %v2189 = vpop.f32.mrf.mxu0
        %v2190 = vadd.f32 %v2036, %v2189
        %v2191 = vpop.f32.mrf.mxu0
        %v2192 = vadd.f32 %v2036, %v2191
        %2193 = vmatprep.mubr.f32.mxu0 0.0
        %2194 = vmatmul.mubr.f32.gmra.mxu0 %v1962
        %v2195 = vpop.f32.mrf.mxu0
        %v2196 = vadd.f32 %v2041, %v2195
        %v2197 = vpop.f32.mrf.mxu0
        %v2198 = vadd.f32 %v2041, %v2197
        %2199 = vmatprep.mubr.f32.mxu0 0.0
        %2200 = vmatmul.mubr.f32.gmra.mxu0 %v1963
        %v2201 = vpop.f32.mrf.mxu0
        %v2202 = vadd.f32 %v2046, %v2201
        %v2203 = vpop.f32.mrf.mxu0
        %v2204 = vadd.f32 %v2046, %v2203
        %2205 = vmatprep.mubr.f32.mxu0 0.0
        %2206 = vmatmul.mubr.f32.gmra.mxu0 %v1964
        %v2207 = vpop.f32.mrf.mxu0
        %v2208 = vadd.f32 %v2051, %v2207
        %v2209 = vpop.f32.mrf.mxu0
        %v2210 = vadd.f32 %v2051, %v2209
        %2211 = vmatprep.mubr.f32.mxu0 0.0
        %2212 = vmatmul.mubr.f32.gmra.mxu0 %v1965
        %v2213 = vpop.f32.mrf.mxu0
        %v2214 = vadd.f32 %v2056, %v2213
        %v2215 = vpop.f32.mrf.mxu0
        %v2216 = vadd.f32 %v2056, %v2215
        %2217 = vmatprep.mubr.f32.mxu0 0.0
        %2218 = vmatmul.mubr.f32.gmra.mxu0 %v1966
        %v2219 = vpop.f32.mrf.mxu0
        %v2220 = vadd.f32 %v2061, %v2219
        %v2221 = vpop.f32.mrf.mxu0
        %v2222 = vadd.f32 %v2061, %v2221
        %2223 = vdwg.mxu0
        %v2224 = vmax.f32 %v2130, 0.0
        %v2225 = vmax.f32 %v2132, 0.0
        %v2226 = vmax.f32 %v2136, 0.0
        %v2227 = vmax.f32 %v2138, 0.0
        %v2228 = vmax.f32 %v2142, 0.0
        %v2229 = vmax.f32 %v2144, 0.0
        %v2230 = vmax.f32 %v2148, 0.0
        %v2231 = vmax.f32 %v2150, 0.0
        %v2232 = vmax.f32 %v2154, 0.0
        %v2233 = vmax.f32 %v2156, 0.0
        %v2234 = vmax.f32 %v2160, 0.0
        %v2235 = vmax.f32 %v2162, 0.0
        %v2236 = vmax.f32 %v2166, 0.0
        %v2237 = vmax.f32 %v2168, 0.0
        %v2238 = vmax.f32 %v2172, 0.0
        %v2239 = vmax.f32 %v2174, 0.0
        %v2240 = vmax.f32 %v2178, 0.0
        %v2241 = vmax.f32 %v2180, 0.0
        %v2242 = vmax.f32 %v2184, 0.0
        %v2243 = vmax.f32 %v2186, 0.0
        %v2244 = vmax.f32 %v2190, 0.0
        %v2245 = vmax.f32 %v2192, 0.0
        %v2246 = vmax.f32 %v2196, 0.0
        %v2247 = vmax.f32 %v2198, 0.0
        %v2248 = vmax.f32 %v2202, 0.0
        %v2249 = vmax.f32 %v2204, 0.0
        %v2250 = vmax.f32 %v2208, 0.0
        %v2251 = vmax.f32 %v2210, 0.0
        %v2252 = vmax.f32 %v2214, 0.0
        %v2253 = vmax.f32 %v2216, 0.0
        %v2254 = vmax.f32 %v2220, 0.0
        %v2255 = vmax.f32 %v2222, 0.0
        %v2256 = vld [vmem:[%s11] sm:$0x7]
        %v2257 = vld [vmem:[#allocation6] sm:$0x7]
        %2259 = vset.pattern.permute.xlu0 0
        %2260 = vperm.xlu0 %2259, %v2257
        %v2261 = vpop.permute.xlu0 %2260
        %2263 = vmatprep.subr.mxu0 %v2255
        %2264 = vmatpush1.msra.mxu0 %v2254
        %2265 = vmatprep.subr.mxu0 %v2253
        %2266 = vmatpush1.msra.mxu0 %v2252
        %2267 = vmatprep.subr.mxu0 %v2251
        %2268 = vmatpush1.msra.mxu0 %v2250
        %2269 = vmatprep.subr.mxu0 %v2249
        %2270 = vmatpush1.msra.mxu0 %v2248
        %2271 = vmatprep.subr.mxu0 %v2247
        %2272 = vmatpush1.msra.mxu0 %v2246
        %2273 = vmatprep.subr.mxu0 %v2245
        %2274 = vmatpush1.msra.mxu0 %v2244
        %2275 = vmatprep.subr.mxu0 %v2243
        %2276 = vmatpush1.msra.mxu0 %v2242
        %2277 = vmatprep.subr.mxu0 %v2241
        %2278 = vmatpush1.msra.mxu0 %v2240
        %2279 = vmatprep.subr.mxu0 %v2239
        %2280 = vmatpush1.msra.mxu0 %v2238
        %2281 = vmatprep.subr.mxu0 %v2237
        %2282 = vmatpush1.msra.mxu0 %v2236
        %2283 = vmatprep.subr.mxu0 %v2235
        %2284 = vmatpush1.msra.mxu0 %v2234
        %2285 = vmatprep.subr.mxu0 %v2233
        %2286 = vmatpush1.msra.mxu0 %v2232
        %2287 = vmatprep.subr.mxu0 %v2231
        %2288 = vmatpush1.msra.mxu0 %v2230
        %2289 = vmatprep.subr.mxu0 %v2229
        %2290 = vmatpush1.msra.mxu0 %v2228
        %2291 = vmatprep.subr.mxu0 %v2227
        %2292 = vmatpush1.msra.mxu0 %v2226
        %2293 = vmatprep.subr.mxu0 %v2225
        %2294 = vmatpush1.msra.mxu0 %v2224
        %2295 = vmatprep.subr.mxu0 0.0
        %2296 = vmatpush2.msra.mxu0 0.0
        %2297 = vmatprep.subr.mxu0 0.0
        %2298 = vmatpush2.msra.mxu0 0.0
        %2299 = vmatprep.subr.mxu0 0.0
        %2300 = vmatpush2.msra.mxu0 0.0
        %2301 = vmatprep.subr.mxu0 0.0
        %2302 = vmatpush2.msra.mxu0 0.0
        %2303 = vmatprep.subr.mxu0 0.0
        %2304 = vmatpush2.msra.mxu0 0.0
        %2305 = vmatprep.subr.mxu0 0.0
        %2306 = vmatpush2.msra.mxu0 0.0
        %2307 = vmatprep.subr.mxu0 0.0
        %2308 = vmatpush2.msra.mxu0 0.0
        %2309 = vmatprep.subr.mxu0 0.0
        %2310 = vmatpush2.msra.mxu0 0.0
        %2311 = vmatprep.subr.mxu0 0.0
        %2312 = vmatpush2.msra.mxu0 0.0
        %2313 = vmatprep.subr.mxu0 0.0
        %2314 = vmatpush2.msra.mxu0 0.0
        %2315 = vmatprep.subr.mxu0 0.0
        %2316 = vmatpush2.msra.mxu0 0.0
        %2317 = vmatprep.subr.mxu0 0.0
        %2318 = vmatpush2.msra.mxu0 0.0
        %2319 = vmatprep.subr.mxu0 0.0
        %2320 = vmatpush2.msra.mxu0 0.0
        %2321 = vmatprep.subr.mxu0 0.0
        %2322 = vmatpush2.msra.mxu0 0.0
        %2323 = vmatprep.subr.mxu0 0.0
        %2324 = vmatpush2.msra.mxu0 0.0
        %2325 = vmatprep.subr.mxu0 0.0
        %2326 = vmatpush2.msra.mxu0 0.0
        %2327 = vmatprep.mubr.f32.mxu0 0.0
        %2328 = vmatmul.mubr.f32.gmra.mxu0 %v2256
        %v2329 = vpop.f32.mrf.mxu0
        %v2330 = vadd.f32 %v2261, %v2329
        %v2331 = vpop.f32.mrf.mxu0
        %v2332 = vadd.f32 %v2261, %v2331
        %2333 = vdwg.mxu0
        %v2336 = vcombine.low %v2330, %v2332
        %2338 = vst [vmem:[%s544] sm:$0x77] %v2336
        %s2339 = smul.u32 2, %s31
        %p2340 = scmp.lt.s32.totalorder %s30, 1
        %s2341 = scalar_select %p2340, %s30, 1
        %p2342 = scmp.lt.s32.totalorder %s2339, 1
        %s2343 = scalar_select %p2342, %s2339, 1
        %s2344 = smul.addr %s2341, 2
        %s2345 = sadd.s32 %s2343, %s2344
        %s2346 = smul.addr %s2345, 4
        %s2347 = scalar_lea.vmem %s13, %s2346
        // Predicated region
        $region85: #{_lambda_.1} parent=71 // pred_check
          %p2348 = pneg %p346
        $region86: #{_lambda_.1} parent=71 // pred_check_branch
          %2350 = sbr.rel (%p2348) target = $region88
        $region87: #{_lambda_.1} parent=71 // pred_region
          %s2351 = smul.u32 2, %s31
        $region88: #{_lambda_.1} parent=71 // pred_fallthru
          _
      $region72: #{_lambda_.1} parent=5 // pred_fallthru
        _
      %p2352 = scmp.le.s32.totalorder 2, %s21
      // Predicated region
      $region89: #{_lambda_.1} parent=5 // pred_check
        %p2353 = pneg %p2352
      $region90: #{_lambda_.1} parent=5 // pred_check_branch
        %2355 = sbr.rel (%p2353) target = $region92
      $region91: #{_lambda_.1} parent=5 // pred_region
        %s2356 = ssub.s32 %s21, 2
        // Predicated region
        $region93: #{_lambda_.1} parent=91 // pred_check
          %p2357 = pneg %p352
        $region94: #{_lambda_.1} parent=91 // pred_check_branch
          %2359 = sbr.rel (%p2357) target = $region96
        $region95: #{_lambda_.1} parent=91 // pred_region
          %s2360 = smul.u32 2, %s33
          %p2361 = scmp.lt.s32.totalorder %s32, 1
          %s2362 = scalar_select %p2361, %s32, 1
          %p2363 = scmp.lt.s32.totalorder %s2360, 1
          %s2364 = scalar_select %p2363, %s2360, 1
          %s2365 = smul.addr %s2362, 2
          %s2366 = sadd.s32 %s2364, %s2365
          %s2367 = smul.addr %s2366, 4
          %s2368 = scalar_lea.vmem %s13, %s2367
        $region96: #{_lambda_.1} parent=91 // pred_fallthru
          _
      $region92: #{_lambda_.1} parent=5 // pred_fallthru
        _
    $region6: #{_lambda_.1} parent=1 // loop_footer
      %s25 = sadd.s32 1, %s21
    $region7: #{_lambda_.1} parent=1 // loop_footer_branch
      %20 = sbr.rel target = $region3
    $region8: #{_lambda_.1} parent=1 // loop_exit
      _
    %2369 = vsyncpa [#allocation3], 1
    %s2370 = scalar_lea.sflag [#allocation3], 1
    %2371 = vsyncpa %s2370, 1
    %2372 = vsyncpa [#allocation5], 1

</llo_original>
